<compile_context>
chip_gen: v5e
topology: v5e:2x2
jax: 0.10.0
libtpu: 0.0.40
codegen_flags: <defaults>
</compile_context>

<pallas_src>
import jax
import jax.numpy as jnp
import numpy as np
from jax import lax
from jax.experimental import pallas as pl
from jax.experimental.pallas import tpu as pltpu

# ---------------- model hyper-parameters (small, deterministic) --------------
N_FEATURES = 4
N_HIDDEN = 32
N_SEQUENCE = 8
N_LAYERS = 2          # fused kernel below is specialized to 2 layers
N_CLASSES = 5
HEAD_HIDDEN = 128
HEAD_PAD = 128        # lane-dense padded head output width
BATCH = 8             # fills the 8 vreg sublanes

assert N_LAYERS == 2, "fused kernel is written for the 2-layer PureLSTM config"


# ---------------------------- fused Pallas kernel -----------------------------
def fused_lstm_head_kernel(
    x2d_ref,     # (B*T, F)   batch-major flattened input (f32)
    w_ih0_ref,   # (F, 4H)    layer-0 input weights (f32)
    b0_ref,      # (1, 4H)    layer-0 combined bias (b_ih + b_hh)
    w_rec_ref,   # (2H, 8H)   bf16 block weight [[w_hh0, w_ih1], [0, w_hh1]]
    b1_ref,      # (1, 4H)    layer-1 combined bias
    w1_ref,      # (H, 128)   head Linear 1 weights
    bh1_ref,     # (1, 128)   head Linear 1 bias
    w2_ref,      # (128, 128) head Linear 2 weights (lane-padded to 128 cols)
    bh2_ref,     # (1, 128)   head Linear 2 bias (lane-padded)
    out_ref,     # (B, 128)   lane-padded logits
):
    B = out_ref.shape[0]
    H = w1_ref.shape[0]
    G = 4 * H
    T = x2d_ref.shape[0] // B

    # Hoisted layer-0 input projection: one (B*T,F)x(F,4H) MXU pass + bias.
    # Off the serial recurrence chain, so kept in f32.
    xw0 = (
        jnp.dot(x2d_ref[...], w_ih0_ref[...], preferred_element_type=jnp.float32)
        + b0_ref[...]
    )                                   # (B*T, 4H), batch-major rows (b*T + t)
    xw0 = xw0.reshape(B, T, G)          # pure vreg relabeling; slice per t below

    # Recurrent weights / bias stay resident for the whole unrolled loop.
    w_rec = w_rec_ref[...]              # (2H, 8H) bf16
    b1 = b1_ref[...]                    # (1, 4H)  f32

    def cell(gates, c):
        # Full-width transcendentals: one sigmoid + one tanh over ALL gates,
        # then slice i/f/g/o (PyTorch order).  Cell math stays f32.
        sig = jax.nn.sigmoid(gates)
        th = jnp.tanh(gates)
        i_g = sig[:, 0 * H:1 * H]
        f_g = sig[:, 1 * H:2 * H]
        g_g = th[:, 2 * H:3 * H]
        o_g = sig[:, 3 * H:4 * H]
        c_new = f_g * c + i_g * g_g
        h_new = o_g * jnp.tanh(c_new)
        return h_new, c_new

    zeros = jnp.zeros((B, H), jnp.float32)

    # ---- prologue: layer-0 step 0 (h0_{-1}=c0_{-1}=0 -> gates = xw0[:,0]) ---
    h0, c0 = cell(xw0[:, 0, :], zeros)
    h1, c1 = zeros, zeros               # layer-1 state at t = -1

    # ---- steady state (software-pipelined, statically unrolled) -------------
    # Iteration t computes layer-0 step t AND layer-1 step t-1; both consume
    # h0_{t-1}, so a single fused matmul produces all 8H gate pre-activations:
    #   [h0_{t-1} | h1_{t-2}] @ [[w_hh0, w_ih1], [0, w_hh1]]  -> (B, 8H)
    for t in range(1, T):
        hcat = jnp.concatenate([h0, h1], axis=1).astype(jnp.bfloat16)     # (B, 2H)
        gall = jnp.dot(hcat, w_rec, preferred_element_type=jnp.float32)   # (B, 8H)
        g0 = xw0[:, t, :] + gall[:, :G]     # layer-0 gates, step t
        g1 = gall[:, G:] + b1               # layer-1 gates, step t-1
        # Stack both cells along sublanes ((2B,4H)) and evaluate once.
        h_new, c_new = cell(
            jnp.concatenate([g0, g1], axis=0),    # (2B, 4H)
            jnp.concatenate([c0, c1], axis=0),    # (2B, H)
        )
        h0, h1 = h_new[:B], h_new[B:]
        c0, c1 = c_new[:B], c_new[B:]

    # ---- epilogue: final layer-1 step T-1 (consumes h0_{T-1}, h1_{T-2}) -----
    hcat = jnp.concatenate([h0, h1], axis=1).astype(jnp.bfloat16)
    gall = jnp.dot(hcat, w_rec, preferred_element_type=jnp.float32)
    h1, c1 = cell(gall[:, G:] + b1, c1)

    # ---- MLP head on the final top-layer hidden state (== out[:, -1, :]) ----
    z = jnp.dot(h1, w1_ref[...], preferred_element_type=jnp.float32) + bh1_ref[...]
    # TODO(synk): Dropout(p=0.2) is identity in eval mode; training-mode masking not implemented.
    out_ref[...] = (
        jnp.dot(z, w2_ref[...], preferred_element_type=jnp.float32) + bh2_ref[...]
    )


# ------------------------------ wrapper ---------------------------------------
_VMEM_SPEC = pl.BlockSpec(memory_space=pltpu.MemorySpace.VMEM)


@jax.jit
def pure_lstm_forward(x, params):
    B = x.shape[0]
    # matches torch: x.view(len(x), n_sequence, -1); then flatten batch-major.
    # Both reshapes are contiguous -> free, no transpose / copy kernel launch.
    x2d = x.reshape(B * N_SEQUENCE, -1).astype(jnp.float32)

    out_pad = pl.pallas_call(
        fused_lstm_head_kernel,
        out_shape=jax.ShapeDtypeStruct((B, HEAD_PAD), jnp.float32),
        in_specs=[_VMEM_SPEC] * 9,
        out_specs=_VMEM_SPEC,
        # Single tiny block -> no grid.  For large batches: grid over batch
        # blocks + pltpu.CompilerParams(dimension_semantics=("parallel",)) so
        # both v7x TensorCores take half the batch each.
    )(
        x2d,
        params["w_ih0_t"], params["b0"],
        params["w_rec"], params["b1"],
        params["w1_t"], params["b1_head"],
        params["w2_pad"], params["b2_pad"],
    )
    return out_pad[:, :N_CLASSES]


# ------------------------- deterministic parameters ---------------------------
def init_params(key):
    k = 1.0 / np.sqrt(N_HIDDEN)

    def unif(key, shape, bound):
        return jax.random.uniform(key, shape, jnp.float32, minval=-bound, maxval=bound)

    keys = jax.random.split(key, 4 * N_LAYERS + 4)
    idx = 0
    lstm = []
    for layer in range(N_LAYERS):
        in_size = N_FEATURES if layer == 0 else N_HIDDEN
        w_ih = unif(keys[idx], (4 * N_HIDDEN, in_size), k); idx += 1   # torch layout
        w_hh = unif(keys[idx], (4 * N_HIDDEN, N_HIDDEN), k); idx += 1
        b_ih = unif(keys[idx], (4 * N_HIDDEN,), k); idx += 1
        b_hh = unif(keys[idx], (4 * N_HIDDEN,), k); idx += 1
        lstm.append({
            "w_ih_t": w_ih.T,                                 # (in, 4H)
            "w_hh_t": w_hh.T,                                 # (H, 4H)
            "b": (b_ih + b_hh).reshape(1, 4 * N_HIDDEN),      # (1, 4H)
        })

    kl1 = 1.0 / np.sqrt(N_HIDDEN)
    kl2 = 1.0 / np.sqrt(HEAD_HIDDEN)
    w1_t = unif(keys[idx], (N_HIDDEN, HEAD_HIDDEN), kl1); idx += 1
    b1_head = unif(keys[idx], (1, HEAD_HIDDEN), kl1); idx += 1
    w2_t = unif(keys[idx], (HEAD_HIDDEN, N_CLASSES), kl2); idx += 1
    b2_head = unif(keys[idx], (1, N_CLASSES), kl2); idx += 1

    # Fused recurrent block weight for the pipelined kernel (bf16 operands,
    # f32 MXU accumulation inside the kernel):
    #   [h0_{t-1} | h1_{t-2}] @ [[w_hh0, w_ih1], [0, w_hh1]]  -> (2H, 8H)=(64,256)
    w_rec = jnp.concatenate(
        [
            jnp.concatenate([lstm[0]["w_hh_t"], lstm[1]["w_ih_t"]], axis=1),
            jnp.concatenate(
                [jnp.zeros((N_HIDDEN, 4 * N_HIDDEN), jnp.float32), lstm[1]["w_hh_t"]],
                axis=1),
        ],
        axis=0,
    ).astype(jnp.bfloat16)

    # Lane-pad head Linear-2 to 128 output lanes (lane-dense store in kernel).
    w2_pad = jnp.zeros((HEAD_HIDDEN, HEAD_PAD), jnp.float32).at[:, :N_CLASSES].set(w2_t)
    b2_pad = jnp.zeros((1, HEAD_PAD), jnp.float32).at[:, :N_CLASSES].set(b2_head)

    return {
        "lstm": lstm,                    # unfused f32 weights (reference path)
        "w_ih0_t": lstm[0]["w_ih_t"],
        "b0": lstm[0]["b"],
        "w_rec": w_rec,
        "b1": lstm[1]["b"],
        "w1_t": w1_t, "b1_head": b1_head,
        "w2_t": w2_t, "b2_head": b2_head,
        "w2_pad": w2_pad, "b2_pad": b2_pad,
    }


# ----------------------------- pure-JAX reference -----------------------------
def reference_forward(x, params):
    B = x.shape[0]
    x = x.reshape(B, N_SEQUENCE, -1).astype(jnp.float32)
    seq = jnp.transpose(x, (1, 0, 2))
    H = N_HIDDEN
    for layer in params["lstm"]:
        def step(carry, x_t, layer=layer):
            h, c = carry
            gates = x_t @ layer["w_ih_t"] + h @ layer["w_hh_t"] + layer["b"]
            i = jax.nn.sigmoid(gates[:, 0 * H:1 * H])
            f = jax.nn.sigmoid(gates[:, 1 * H:2 * H])
            g = jnp.tanh(gates[:, 2 * H:3 * H])
            o = jax.nn.sigmoid(gates[:, 3 * H:4 * H])
            c = f * c + i * g
            h = o * jnp.tanh(c)
            return (h, c), h
        init = (jnp.zeros((B, H), jnp.float32), jnp.zeros((B, H), jnp.float32))
        _, seq = lax.scan(step, init, seq)
    last = seq[-1]
    z = last @ params["w1_t"] + params["b1_head"]
    return z @ params["w2_t"] + params["b2_head"]


# ------------------------------------ main -------------------------------------
if __name__ == "__main__":
    key = jax.random.PRNGKey(0)
    kx, kp = jax.random.split(key)
    # input: (batch, n_sequence, n_features), matching batch_first LSTM input
    x = jax.random.normal(kx, (BATCH, N_SEQUENCE, N_FEATURES), jnp.float32)
    params = init_params(kp)

    out = pure_lstm_forward(x, params)
    out = jax.block_until_ready(out)
    assert out.shape == (BATCH, N_CLASSES)

    ref = reference_forward(x, params)
    # Tolerance accounts for bf16 MXU operands on the recurrent path
    # (f32 accumulation, f32 cell/EUP math); typical logit error is ~1e-3.
    np.testing.assert_allclose(np.asarray(out), np.asarray(ref), rtol=1e-2, atol=1e-2)

    print("KERNEL_OK")
</pallas_src>

<mosaic_0001>
module attributes {stable_mosaic.version = 11 : i64} {
  func.func @fused_lstm_head_kernel(%arg0: memref<64x4xf32, #tpu.memory_space<vmem>>, %arg1: memref<4x128xf32, #tpu.memory_space<vmem>>, %arg2: memref<1x128xf32, #tpu.memory_space<vmem>>, %arg3: memref<64x256xbf16, #tpu.memory_space<vmem>>, %arg4: memref<1x128xf32, #tpu.memory_space<vmem>>, %arg5: memref<32x128xf32, #tpu.memory_space<vmem>>, %arg6: memref<1x128xf32, #tpu.memory_space<vmem>>, %arg7: memref<128x128xf32, #tpu.memory_space<vmem>>, %arg8: memref<1x128xf32, #tpu.memory_space<vmem>>, %arg9: memref<8x128xf32, #tpu.memory_space<vmem>>) attributes {dimension_semantics = [], scalar_prefetch = 0 : i64, scratch_operands = 0 : i64, tpu.core_type = #tpu.core_type<tc>} {
    %c0 = arith.constant 0 : index
    %c0_0 = arith.constant 0 : index
    %0 = vector.load %arg0[%c0, %c0_0] : memref<64x4xf32, #tpu.memory_space<vmem>>, vector<64x4xf32>
    %c0_1 = arith.constant 0 : index
    %c0_2 = arith.constant 0 : index
    %1 = vector.load %arg1[%c0_1, %c0_2] : memref<4x128xf32, #tpu.memory_space<vmem>>, vector<4x128xf32>
    %cst = arith.constant dense<0.000000e+00> : vector<64x128xf32>
    %2 = tpu.matmul %0, %1, %cst {dimension_numbers = #tpu.dot_dimension_numbers<[1], [0], [0], [1], [0, 0, 1, 1], [], []>} : vector<64x4xf32>, vector<4x128xf32>, vector<64x128xf32> -> vector<64x128xf32>
    %c0_3 = arith.constant 0 : index
    %c0_4 = arith.constant 0 : index
    %3 = vector.load %arg2[%c0_3, %c0_4] : memref<1x128xf32, #tpu.memory_space<vmem>>, vector<1x128xf32>
    %4 = vector.broadcast %3 : vector<1x128xf32> to vector<64x128xf32>
    %5 = arith.addf %2, %4 : vector<64x128xf32>
    %6 = vector.shape_cast %5 : vector<64x128xf32> to vector<8x8x128xf32>
    %c0_5 = arith.constant 0 : index
    %c0_6 = arith.constant 0 : index
    %7 = vector.load %arg3[%c0_5, %c0_6] : memref<64x256xbf16, #tpu.memory_space<vmem>>, vector<64x256xbf16>
    %c0_7 = arith.constant 0 : index
    %c0_8 = arith.constant 0 : index
    %8 = vector.load %arg4[%c0_7, %c0_8] : memref<1x128xf32, #tpu.memory_space<vmem>>, vector<1x128xf32>
    %cst_9 = arith.constant 0.000000e+00 : f32
    %9 = vector.broadcast %cst_9 : f32 to vector<8x32xf32>
    %10 = vector.extract_strided_slice %6 {offsets = [0, 0, 0], sizes = [8, 1, 128], strides = [1, 1, 1]} : vector<8x8x128xf32> to vector<8x1x128xf32>
    %11 = vector.shape_cast %10 : vector<8x1x128xf32> to vector<8x128xf32>
    %12 = arith.negf %11 : vector<8x128xf32>
    %13 = math.exp %12 : vector<8x128xf32>
    %cst_10 = arith.constant 1.000000e+00 : f32
    %14 = vector.broadcast %cst_10 : f32 to vector<8x128xf32>
    %15 = arith.addf %14, %13 : vector<8x128xf32>
    %16 = arith.divf %14, %15 : vector<8x128xf32>
    %17 = math.tanh %11 : vector<8x128xf32>
    %18 = vector.extract_strided_slice %16 {offsets = [0, 0], sizes = [8, 32], strides = [1, 1]} : vector<8x128xf32> to vector<8x32xf32>
    %19 = vector.extract_strided_slice %16 {offsets = [0, 32], sizes = [8, 32], strides = [1, 1]} : vector<8x128xf32> to vector<8x32xf32>
    %20 = vector.extract_strided_slice %17 {offsets = [0, 64], sizes = [8, 32], strides = [1, 1]} : vector<8x128xf32> to vector<8x32xf32>
    %21 = vector.extract_strided_slice %16 {offsets = [0, 96], sizes = [8, 32], strides = [1, 1]} : vector<8x128xf32> to vector<8x32xf32>
    %22 = arith.mulf %19, %9 : vector<8x32xf32>
    %23 = arith.mulf %18, %20 : vector<8x32xf32>
    %24 = arith.addf %22, %23 : vector<8x32xf32>
    %25 = math.tanh %24 : vector<8x32xf32>
    %26 = arith.mulf %21, %25 : vector<8x32xf32>
    %27 = tpu.concatenate %26, %9 in 1 : vector<8x32xf32>, vector<8x32xf32> -> vector<8x64xf32>
    %28 = arith.truncf %27 : vector<8x64xf32> to vector<8x64xbf16>
    %cst_11 = arith.constant dense<0.000000e+00> : vector<8x256xf32>
    %29 = tpu.matmul %28, %7, %cst_11 {dimension_numbers = #tpu.dot_dimension_numbers<[1], [0], [0], [1], [0, 0, 1, 1], [], []>} : vector<8x64xbf16>, vector<64x256xbf16>, vector<8x256xf32> -> vector<8x256xf32>
    %30 = vector.extract_strided_slice %6 {offsets = [0, 1, 0], sizes = [8, 1, 128], strides = [1, 1, 1]} : vector<8x8x128xf32> to vector<8x1x128xf32>
    %31 = vector.shape_cast %30 : vector<8x1x128xf32> to vector<8x128xf32>
    %32 = vector.extract_strided_slice %29 {offsets = [0, 0], sizes = [8, 128], strides = [1, 1]} : vector<8x256xf32> to vector<8x128xf32>
    %33 = arith.addf %31, %32 : vector<8x128xf32>
    %34 = vector.extract_strided_slice %29 {offsets = [0, 128], sizes = [8, 128], strides = [1, 1]} : vector<8x256xf32> to vector<8x128xf32>
    %35 = vector.broadcast %8 : vector<1x128xf32> to vector<8x128xf32>
    %36 = arith.addf %34, %35 : vector<8x128xf32>
    %37 = tpu.concatenate %33, %36 in 0 : vector<8x128xf32>, vector<8x128xf32> -> vector<16x128xf32>
    %38 = tpu.concatenate %24, %9 in 0 : vector<8x32xf32>, vector<8x32xf32> -> vector<16x32xf32>
    %39 = arith.negf %37 : vector<16x128xf32>
    %40 = math.exp %39 : vector<16x128xf32>
    %cst_12 = arith.constant 1.000000e+00 : f32
    %41 = vector.broadcast %cst_12 : f32 to vector<16x128xf32>
    %42 = arith.addf %41, %40 : vector<16x128xf32>
    %43 = arith.divf %41, %42 : vector<16x128xf32>
    %44 = math.tanh %37 : vector<16x128xf32>
    %45 = vector.extract_strided_slice %43 {offsets = [0, 0], sizes = [16, 32], strides = [1, 1]} : vector<16x128xf32> to vector<16x32xf32>
    %46 = vector.extract_strided_slice %43 {offsets = [0, 32], sizes = [16, 32], strides = [1, 1]} : vector<16x128xf32> to vector<16x32xf32>
    %47 = vector.extract_strided_slice %44 {offsets = [0, 64], sizes = [16, 32], strides = [1, 1]} : vector<16x128xf32> to vector<16x32xf32>
    %48 = vector.extract_strided_slice %43 {offsets = [0, 96], sizes = [16, 32], strides = [1, 1]} : vector<16x128xf32> to vector<16x32xf32>
    %49 = arith.mulf %46, %38 : vector<16x32xf32>
    %50 = arith.mulf %45, %47 : vector<16x32xf32>
    %51 = arith.addf %49, %50 : vector<16x32xf32>
    %52 = math.tanh %51 : vector<16x32xf32>
    %53 = arith.mulf %48, %52 : vector<16x32xf32>
    %54 = vector.extract_strided_slice %53 {offsets = [0, 0], sizes = [8, 32], strides = [1, 1]} : vector<16x32xf32> to vector<8x32xf32>
    %55 = vector.extract_strided_slice %53 {offsets = [8, 0], sizes = [8, 32], strides = [1, 1]} : vector<16x32xf32> to vector<8x32xf32>
    %56 = vector.extract_strided_slice %51 {offsets = [0, 0], sizes = [8, 32], strides = [1, 1]} : vector<16x32xf32> to vector<8x32xf32>
    %57 = vector.extract_strided_slice %51 {offsets = [8, 0], sizes = [8, 32], strides = [1, 1]} : vector<16x32xf32> to vector<8x32xf32>
    %58 = tpu.concatenate %54, %55 in 1 : vector<8x32xf32>, vector<8x32xf32> -> vector<8x64xf32>
    %59 = arith.truncf %58 : vector<8x64xf32> to vector<8x64xbf16>
    %cst_13 = arith.constant dense<0.000000e+00> : vector<8x256xf32>
    %60 = tpu.matmul %59, %7, %cst_13 {dimension_numbers = #tpu.dot_dimension_numbers<[1], [0], [0], [1], [0, 0, 1, 1], [], []>} : vector<8x64xbf16>, vector<64x256xbf16>, vector<8x256xf32> -> vector<8x256xf32>
    %61 = vector.extract_strided_slice %6 {offsets = [0, 2, 0], sizes = [8, 1, 128], strides = [1, 1, 1]} : vector<8x8x128xf32> to vector<8x1x128xf32>
    %62 = vector.shape_cast %61 : vector<8x1x128xf32> to vector<8x128xf32>
    %63 = vector.extract_strided_slice %60 {offsets = [0, 0], sizes = [8, 128], strides = [1, 1]} : vector<8x256xf32> to vector<8x128xf32>
    %64 = arith.addf %62, %63 : vector<8x128xf32>
    %65 = vector.extract_strided_slice %60 {offsets = [0, 128], sizes = [8, 128], strides = [1, 1]} : vector<8x256xf32> to vector<8x128xf32>
    %66 = vector.broadcast %8 : vector<1x128xf32> to vector<8x128xf32>
    %67 = arith.addf %65, %66 : vector<8x128xf32>
    %68 = tpu.concatenate %64, %67 in 0 : vector<8x128xf32>, vector<8x128xf32> -> vector<16x128xf32>
    %69 = tpu.concatenate %56, %57 in 0 : vector<8x32xf32>, vector<8x32xf32> -> vector<16x32xf32>
    %70 = arith.negf %68 : vector<16x128xf32>
    %71 = math.exp %70 : vector<16x128xf32>
    %cst_14 = arith.constant 1.000000e+00 : f32
    %72 = vector.broadcast %cst_14 : f32 to vector<16x128xf32>
    %73 = arith.addf %72, %71 : vector<16x128xf32>
    %74 = arith.divf %72, %73 : vector<16x128xf32>
    %75 = math.tanh %68 : vector<16x128xf32>
    %76 = vector.extract_strided_slice %74 {offsets = [0, 0], sizes = [16, 32], strides = [1, 1]} : vector<16x128xf32> to vector<16x32xf32>
    %77 = vector.extract_strided_slice %74 {offsets = [0, 32], sizes = [16, 32], strides = [1, 1]} : vector<16x128xf32> to vector<16x32xf32>
    %78 = vector.extract_strided_slice %75 {offsets = [0, 64], sizes = [16, 32], strides = [1, 1]} : vector<16x128xf32> to vector<16x32xf32>
    %79 = vector.extract_strided_slice %74 {offsets = [0, 96], sizes = [16, 32], strides = [1, 1]} : vector<16x128xf32> to vector<16x32xf32>
    %80 = arith.mulf %77, %69 : vector<16x32xf32>
    %81 = arith.mulf %76, %78 : vector<16x32xf32>
    %82 = arith.addf %80, %81 : vector<16x32xf32>
    %83 = math.tanh %82 : vector<16x32xf32>
    %84 = arith.mulf %79, %83 : vector<16x32xf32>
    %85 = vector.extract_strided_slice %84 {offsets = [0, 0], sizes = [8, 32], strides = [1, 1]} : vector<16x32xf32> to vector<8x32xf32>
    %86 = vector.extract_strided_slice %84 {offsets = [8, 0], sizes = [8, 32], strides = [1, 1]} : vector<16x32xf32> to vector<8x32xf32>
    %87 = vector.extract_strided_slice %82 {offsets = [0, 0], sizes = [8, 32], strides = [1, 1]} : vector<16x32xf32> to vector<8x32xf32>
    %88 = vector.extract_strided_slice %82 {offsets = [8, 0], sizes = [8, 32], strides = [1, 1]} : vector<16x32xf32> to vector<8x32xf32>
    %89 = tpu.concatenate %85, %86 in 1 : vector<8x32xf32>, vector<8x32xf32> -> vector<8x64xf32>
    %90 = arith.truncf %89 : vector<8x64xf32> to vector<8x64xbf16>
    %cst_15 = arith.constant dense<0.000000e+00> : vector<8x256xf32>
    %91 = tpu.matmul %90, %7, %cst_15 {dimension_numbers = #tpu.dot_dimension_numbers<[1], [0], [0], [1], [0, 0, 1, 1], [], []>} : vector<8x64xbf16>, vector<64x256xbf16>, vector<8x256xf32> -> vector<8x256xf32>
    %92 = vector.extract_strided_slice %6 {offsets = [0, 3, 0], sizes = [8, 1, 128], strides = [1, 1, 1]} : vector<8x8x128xf32> to vector<8x1x128xf32>
    %93 = vector.shape_cast %92 : vector<8x1x128xf32> to vector<8x128xf32>
    %94 = vector.extract_strided_slice %91 {offsets = [0, 0], sizes = [8, 128], strides = [1, 1]} : vector<8x256xf32> to vector<8x128xf32>
    %95 = arith.addf %93, %94 : vector<8x128xf32>
    %96 = vector.extract_strided_slice %91 {offsets = [0, 128], sizes = [8, 128], strides = [1, 1]} : vector<8x256xf32> to vector<8x128xf32>
    %97 = vector.broadcast %8 : vector<1x128xf32> to vector<8x128xf32>
    %98 = arith.addf %96, %97 : vector<8x128xf32>
    %99 = tpu.concatenate %95, %98 in 0 : vector<8x128xf32>, vector<8x128xf32> -> vector<16x128xf32>
    %100 = tpu.concatenate %87, %88 in 0 : vector<8x32xf32>, vector<8x32xf32> -> vector<16x32xf32>
    %101 = arith.negf %99 : vector<16x128xf32>
    %102 = math.exp %101 : vector<16x128xf32>
    %cst_16 = arith.constant 1.000000e+00 : f32
    %103 = vector.broadcast %cst_16 : f32 to vector<16x128xf32>
    %104 = arith.addf %103, %102 : vector<16x128xf32>
    %105 = arith.divf %103, %104 : vector<16x128xf32>
    %106 = math.tanh %99 : vector<16x128xf32>
    %107 = vector.extract_strided_slice %105 {offsets = [0, 0], sizes = [16, 32], strides = [1, 1]} : vector<16x128xf32> to vector<16x32xf32>
    %108 = vector.extract_strided_slice %105 {offsets = [0, 32], sizes = [16, 32], strides = [1, 1]} : vector<16x128xf32> to vector<16x32xf32>
    %109 = vector.extract_strided_slice %106 {offsets = [0, 64], sizes = [16, 32], strides = [1, 1]} : vector<16x128xf32> to vector<16x32xf32>
    %110 = vector.extract_strided_slice %105 {offsets = [0, 96], sizes = [16, 32], strides = [1, 1]} : vector<16x128xf32> to vector<16x32xf32>
    %111 = arith.mulf %108, %100 : vector<16x32xf32>
    %112 = arith.mulf %107, %109 : vector<16x32xf32>
    %113 = arith.addf %111, %112 : vector<16x32xf32>
    %114 = math.tanh %113 : vector<16x32xf32>
    %115 = arith.mulf %110, %114 : vector<16x32xf32>
    %116 = vector.extract_strided_slice %115 {offsets = [0, 0], sizes = [8, 32], strides = [1, 1]} : vector<16x32xf32> to vector<8x32xf32>
    %117 = vector.extract_strided_slice %115 {offsets = [8, 0], sizes = [8, 32], strides = [1, 1]} : vector<16x32xf32> to vector<8x32xf32>
    %118 = vector.extract_strided_slice %113 {offsets = [0, 0], sizes = [8, 32], strides = [1, 1]} : vector<16x32xf32> to vector<8x32xf32>
    %119 = vector.extract_strided_slice %113 {offsets = [8, 0], sizes = [8, 32], strides = [1, 1]} : vector<16x32xf32> to vector<8x32xf32>
    %120 = tpu.concatenate %116, %117 in 1 : vector<8x32xf32>, vector<8x32xf32> -> vector<8x64xf32>
    %121 = arith.truncf %120 : vector<8x64xf32> to vector<8x64xbf16>
    %cst_17 = arith.constant dense<0.000000e+00> : vector<8x256xf32>
    %122 = tpu.matmul %121, %7, %cst_17 {dimension_numbers = #tpu.dot_dimension_numbers<[1], [0], [0], [1], [0, 0, 1, 1], [], []>} : vector<8x64xbf16>, vector<64x256xbf16>, vector<8x256xf32> -> vector<8x256xf32>
    %123 = vector.extract_strided_slice %6 {offsets = [0, 4, 0], sizes = [8, 1, 128], strides = [1, 1, 1]} : vector<8x8x128xf32> to vector<8x1x128xf32>
    %124 = vector.shape_cast %123 : vector<8x1x128xf32> to vector<8x128xf32>
    %125 = vector.extract_strided_slice %122 {offsets = [0, 0], sizes = [8, 128], strides = [1, 1]} : vector<8x256xf32> to vector<8x128xf32>
    %126 = arith.addf %124, %125 : vector<8x128xf32>
    %127 = vector.extract_strided_slice %122 {offsets = [0, 128], sizes = [8, 128], strides = [1, 1]} : vector<8x256xf32> to vector<8x128xf32>
    %128 = vector.broadcast %8 : vector<1x128xf32> to vector<8x128xf32>
    %129 = arith.addf %127, %128 : vector<8x128xf32>
    %130 = tpu.concatenate %126, %129 in 0 : vector<8x128xf32>, vector<8x128xf32> -> vector<16x128xf32>
    %131 = tpu.concatenate %118, %119 in 0 : vector<8x32xf32>, vector<8x32xf32> -> vector<16x32xf32>
    %132 = arith.negf %130 : vector<16x128xf32>
    %133 = math.exp %132 : vector<16x128xf32>
    %cst_18 = arith.constant 1.000000e+00 : f32
    %134 = vector.broadcast %cst_18 : f32 to vector<16x128xf32>
    %135 = arith.addf %134, %133 : vector<16x128xf32>
    %136 = arith.divf %134, %135 : vector<16x128xf32>
    %137 = math.tanh %130 : vector<16x128xf32>
    %138 = vector.extract_strided_slice %136 {offsets = [0, 0], sizes = [16, 32], strides = [1, 1]} : vector<16x128xf32> to vector<16x32xf32>
    %139 = vector.extract_strided_slice %136 {offsets = [0, 32], sizes = [16, 32], strides = [1, 1]} : vector<16x128xf32> to vector<16x32xf32>
    %140 = vector.extract_strided_slice %137 {offsets = [0, 64], sizes = [16, 32], strides = [1, 1]} : vector<16x128xf32> to vector<16x32xf32>
    %141 = vector.extract_strided_slice %136 {offsets = [0, 96], sizes = [16, 32], strides = [1, 1]} : vector<16x128xf32> to vector<16x32xf32>
    %142 = arith.mulf %139, %131 : vector<16x32xf32>
    %143 = arith.mulf %138, %140 : vector<16x32xf32>
    %144 = arith.addf %142, %143 : vector<16x32xf32>
    %145 = math.tanh %144 : vector<16x32xf32>
    %146 = arith.mulf %141, %145 : vector<16x32xf32>
    %147 = vector.extract_strided_slice %146 {offsets = [0, 0], sizes = [8, 32], strides = [1, 1]} : vector<16x32xf32> to vector<8x32xf32>
    %148 = vector.extract_strided_slice %146 {offsets = [8, 0], sizes = [8, 32], strides = [1, 1]} : vector<16x32xf32> to vector<8x32xf32>
    %149 = vector.extract_strided_slice %144 {offsets = [0, 0], sizes = [8, 32], strides = [1, 1]} : vector<16x32xf32> to vector<8x32xf32>
    %150 = vector.extract_strided_slice %144 {offsets = [8, 0], sizes = [8, 32], strides = [1, 1]} : vector<16x32xf32> to vector<8x32xf32>
    %151 = tpu.concatenate %147, %148 in 1 : vector<8x32xf32>, vector<8x32xf32> -> vector<8x64xf32>
    %152 = arith.truncf %151 : vector<8x64xf32> to vector<8x64xbf16>
    %cst_19 = arith.constant dense<0.000000e+00> : vector<8x256xf32>
    %153 = tpu.matmul %152, %7, %cst_19 {dimension_numbers = #tpu.dot_dimension_numbers<[1], [0], [0], [1], [0, 0, 1, 1], [], []>} : vector<8x64xbf16>, vector<64x256xbf16>, vector<8x256xf32> -> vector<8x256xf32>
    %154 = vector.extract_strided_slice %6 {offsets = [0, 5, 0], sizes = [8, 1, 128], strides = [1, 1, 1]} : vector<8x8x128xf32> to vector<8x1x128xf32>
    %155 = vector.shape_cast %154 : vector<8x1x128xf32> to vector<8x128xf32>
    %156 = vector.extract_strided_slice %153 {offsets = [0, 0], sizes = [8, 128], strides = [1, 1]} : vector<8x256xf32> to vector<8x128xf32>
    %157 = arith.addf %155, %156 : vector<8x128xf32>
    %158 = vector.extract_strided_slice %153 {offsets = [0, 128], sizes = [8, 128], strides = [1, 1]} : vector<8x256xf32> to vector<8x128xf32>
    %159 = vector.broadcast %8 : vector<1x128xf32> to vector<8x128xf32>
    %160 = arith.addf %158, %159 : vector<8x128xf32>
    %161 = tpu.concatenate %157, %160 in 0 : vector<8x128xf32>, vector<8x128xf32> -> vector<16x128xf32>
    %162 = tpu.concatenate %149, %150 in 0 : vector<8x32xf32>, vector<8x32xf32> -> vector<16x32xf32>
    %163 = arith.negf %161 : vector<16x128xf32>
    %164 = math.exp %163 : vector<16x128xf32>
    %cst_20 = arith.constant 1.000000e+00 : f32
    %165 = vector.broadcast %cst_20 : f32 to vector<16x128xf32>
    %166 = arith.addf %165, %164 : vector<16x128xf32>
    %167 = arith.divf %165, %166 : vector<16x128xf32>
    %168 = math.tanh %161 : vector<16x128xf32>
    %169 = vector.extract_strided_slice %167 {offsets = [0, 0], sizes = [16, 32], strides = [1, 1]} : vector<16x128xf32> to vector<16x32xf32>
    %170 = vector.extract_strided_slice %167 {offsets = [0, 32], sizes = [16, 32], strides = [1, 1]} : vector<16x128xf32> to vector<16x32xf32>
    %171 = vector.extract_strided_slice %168 {offsets = [0, 64], sizes = [16, 32], strides = [1, 1]} : vector<16x128xf32> to vector<16x32xf32>
    %172 = vector.extract_strided_slice %167 {offsets = [0, 96], sizes = [16, 32], strides = [1, 1]} : vector<16x128xf32> to vector<16x32xf32>
    %173 = arith.mulf %170, %162 : vector<16x32xf32>
    %174 = arith.mulf %169, %171 : vector<16x32xf32>
    %175 = arith.addf %173, %174 : vector<16x32xf32>
    %176 = math.tanh %175 : vector<16x32xf32>
    %177 = arith.mulf %172, %176 : vector<16x32xf32>
    %178 = vector.extract_strided_slice %177 {offsets = [0, 0], sizes = [8, 32], strides = [1, 1]} : vector<16x32xf32> to vector<8x32xf32>
    %179 = vector.extract_strided_slice %177 {offsets = [8, 0], sizes = [8, 32], strides = [1, 1]} : vector<16x32xf32> to vector<8x32xf32>
    %180 = vector.extract_strided_slice %175 {offsets = [0, 0], sizes = [8, 32], strides = [1, 1]} : vector<16x32xf32> to vector<8x32xf32>
    %181 = vector.extract_strided_slice %175 {offsets = [8, 0], sizes = [8, 32], strides = [1, 1]} : vector<16x32xf32> to vector<8x32xf32>
    %182 = tpu.concatenate %178, %179 in 1 : vector<8x32xf32>, vector<8x32xf32> -> vector<8x64xf32>
    %183 = arith.truncf %182 : vector<8x64xf32> to vector<8x64xbf16>
    %cst_21 = arith.constant dense<0.000000e+00> : vector<8x256xf32>
    %184 = tpu.matmul %183, %7, %cst_21 {dimension_numbers = #tpu.dot_dimension_numbers<[1], [0], [0], [1], [0, 0, 1, 1], [], []>} : vector<8x64xbf16>, vector<64x256xbf16>, vector<8x256xf32> -> vector<8x256xf32>
    %185 = vector.extract_strided_slice %6 {offsets = [0, 6, 0], sizes = [8, 1, 128], strides = [1, 1, 1]} : vector<8x8x128xf32> to vector<8x1x128xf32>
    %186 = vector.shape_cast %185 : vector<8x1x128xf32> to vector<8x128xf32>
    %187 = vector.extract_strided_slice %184 {offsets = [0, 0], sizes = [8, 128], strides = [1, 1]} : vector<8x256xf32> to vector<8x128xf32>
    %188 = arith.addf %186, %187 : vector<8x128xf32>
    %189 = vector.extract_strided_slice %184 {offsets = [0, 128], sizes = [8, 128], strides = [1, 1]} : vector<8x256xf32> to vector<8x128xf32>
    %190 = vector.broadcast %8 : vector<1x128xf32> to vector<8x128xf32>
    %191 = arith.addf %189, %190 : vector<8x128xf32>
    %192 = tpu.concatenate %188, %191 in 0 : vector<8x128xf32>, vector<8x128xf32> -> vector<16x128xf32>
    %193 = tpu.concatenate %180, %181 in 0 : vector<8x32xf32>, vector<8x32xf32> -> vector<16x32xf32>
    %194 = arith.negf %192 : vector<16x128xf32>
    %195 = math.exp %194 : vector<16x128xf32>
    %cst_22 = arith.constant 1.000000e+00 : f32
    %196 = vector.broadcast %cst_22 : f32 to vector<16x128xf32>
    %197 = arith.addf %196, %195 : vector<16x128xf32>
    %198 = arith.divf %196, %197 : vector<16x128xf32>
    %199 = math.tanh %192 : vector<16x128xf32>
    %200 = vector.extract_strided_slice %198 {offsets = [0, 0], sizes = [16, 32], strides = [1, 1]} : vector<16x128xf32> to vector<16x32xf32>
    %201 = vector.extract_strided_slice %198 {offsets = [0, 32], sizes = [16, 32], strides = [1, 1]} : vector<16x128xf32> to vector<16x32xf32>
    %202 = vector.extract_strided_slice %199 {offsets = [0, 64], sizes = [16, 32], strides = [1, 1]} : vector<16x128xf32> to vector<16x32xf32>
    %203 = vector.extract_strided_slice %198 {offsets = [0, 96], sizes = [16, 32], strides = [1, 1]} : vector<16x128xf32> to vector<16x32xf32>
    %204 = arith.mulf %201, %193 : vector<16x32xf32>
    %205 = arith.mulf %200, %202 : vector<16x32xf32>
    %206 = arith.addf %204, %205 : vector<16x32xf32>
    %207 = math.tanh %206 : vector<16x32xf32>
    %208 = arith.mulf %203, %207 : vector<16x32xf32>
    %209 = vector.extract_strided_slice %208 {offsets = [0, 0], sizes = [8, 32], strides = [1, 1]} : vector<16x32xf32> to vector<8x32xf32>
    %210 = vector.extract_strided_slice %208 {offsets = [8, 0], sizes = [8, 32], strides = [1, 1]} : vector<16x32xf32> to vector<8x32xf32>
    %211 = vector.extract_strided_slice %206 {offsets = [0, 0], sizes = [8, 32], strides = [1, 1]} : vector<16x32xf32> to vector<8x32xf32>
    %212 = vector.extract_strided_slice %206 {offsets = [8, 0], sizes = [8, 32], strides = [1, 1]} : vector<16x32xf32> to vector<8x32xf32>
    %213 = tpu.concatenate %209, %210 in 1 : vector<8x32xf32>, vector<8x32xf32> -> vector<8x64xf32>
    %214 = arith.truncf %213 : vector<8x64xf32> to vector<8x64xbf16>
    %cst_23 = arith.constant dense<0.000000e+00> : vector<8x256xf32>
    %215 = tpu.matmul %214, %7, %cst_23 {dimension_numbers = #tpu.dot_dimension_numbers<[1], [0], [0], [1], [0, 0, 1, 1], [], []>} : vector<8x64xbf16>, vector<64x256xbf16>, vector<8x256xf32> -> vector<8x256xf32>
    %216 = vector.extract_strided_slice %6 {offsets = [0, 7, 0], sizes = [8, 1, 128], strides = [1, 1, 1]} : vector<8x8x128xf32> to vector<8x1x128xf32>
    %217 = vector.shape_cast %216 : vector<8x1x128xf32> to vector<8x128xf32>
    %218 = vector.extract_strided_slice %215 {offsets = [0, 0], sizes = [8, 128], strides = [1, 1]} : vector<8x256xf32> to vector<8x128xf32>
    %219 = arith.addf %217, %218 : vector<8x128xf32>
    %220 = vector.extract_strided_slice %215 {offsets = [0, 128], sizes = [8, 128], strides = [1, 1]} : vector<8x256xf32> to vector<8x128xf32>
    %221 = vector.broadcast %8 : vector<1x128xf32> to vector<8x128xf32>
    %222 = arith.addf %220, %221 : vector<8x128xf32>
    %223 = tpu.concatenate %219, %222 in 0 : vector<8x128xf32>, vector<8x128xf32> -> vector<16x128xf32>
    %224 = tpu.concatenate %211, %212 in 0 : vector<8x32xf32>, vector<8x32xf32> -> vector<16x32xf32>
    %225 = arith.negf %223 : vector<16x128xf32>
    %226 = math.exp %225 : vector<16x128xf32>
    %cst_24 = arith.constant 1.000000e+00 : f32
    %227 = vector.broadcast %cst_24 : f32 to vector<16x128xf32>
    %228 = arith.addf %227, %226 : vector<16x128xf32>
    %229 = arith.divf %227, %228 : vector<16x128xf32>
    %230 = math.tanh %223 : vector<16x128xf32>
    %231 = vector.extract_strided_slice %229 {offsets = [0, 0], sizes = [16, 32], strides = [1, 1]} : vector<16x128xf32> to vector<16x32xf32>
    %232 = vector.extract_strided_slice %229 {offsets = [0, 32], sizes = [16, 32], strides = [1, 1]} : vector<16x128xf32> to vector<16x32xf32>
    %233 = vector.extract_strided_slice %230 {offsets = [0, 64], sizes = [16, 32], strides = [1, 1]} : vector<16x128xf32> to vector<16x32xf32>
    %234 = vector.extract_strided_slice %229 {offsets = [0, 96], sizes = [16, 32], strides = [1, 1]} : vector<16x128xf32> to vector<16x32xf32>
    %235 = arith.mulf %232, %224 : vector<16x32xf32>
    %236 = arith.mulf %231, %233 : vector<16x32xf32>
    %237 = arith.addf %235, %236 : vector<16x32xf32>
    %238 = math.tanh %237 : vector<16x32xf32>
    %239 = arith.mulf %234, %238 : vector<16x32xf32>
    %240 = vector.extract_strided_slice %239 {offsets = [0, 0], sizes = [8, 32], strides = [1, 1]} : vector<16x32xf32> to vector<8x32xf32>
    %241 = vector.extract_strided_slice %239 {offsets = [8, 0], sizes = [8, 32], strides = [1, 1]} : vector<16x32xf32> to vector<8x32xf32>
    %242 = vector.extract_strided_slice %237 {offsets = [8, 0], sizes = [8, 32], strides = [1, 1]} : vector<16x32xf32> to vector<8x32xf32>
    %243 = tpu.concatenate %240, %241 in 1 : vector<8x32xf32>, vector<8x32xf32> -> vector<8x64xf32>
    %244 = arith.truncf %243 : vector<8x64xf32> to vector<8x64xbf16>
    %cst_25 = arith.constant dense<0.000000e+00> : vector<8x256xf32>
    %245 = tpu.matmul %244, %7, %cst_25 {dimension_numbers = #tpu.dot_dimension_numbers<[1], [0], [0], [1], [0, 0, 1, 1], [], []>} : vector<8x64xbf16>, vector<64x256xbf16>, vector<8x256xf32> -> vector<8x256xf32>
    %246 = vector.extract_strided_slice %245 {offsets = [0, 128], sizes = [8, 128], strides = [1, 1]} : vector<8x256xf32> to vector<8x128xf32>
    %247 = vector.broadcast %8 : vector<1x128xf32> to vector<8x128xf32>
    %248 = arith.addf %246, %247 : vector<8x128xf32>
    %249 = arith.negf %248 : vector<8x128xf32>
    %250 = math.exp %249 : vector<8x128xf32>
    %cst_26 = arith.constant 1.000000e+00 : f32
    %251 = vector.broadcast %cst_26 : f32 to vector<8x128xf32>
    %252 = arith.addf %251, %250 : vector<8x128xf32>
    %253 = arith.divf %251, %252 : vector<8x128xf32>
    %254 = math.tanh %248 : vector<8x128xf32>
    %255 = vector.extract_strided_slice %253 {offsets = [0, 0], sizes = [8, 32], strides = [1, 1]} : vector<8x128xf32> to vector<8x32xf32>
    %256 = vector.extract_strided_slice %253 {offsets = [0, 32], sizes = [8, 32], strides = [1, 1]} : vector<8x128xf32> to vector<8x32xf32>
    %257 = vector.extract_strided_slice %254 {offsets = [0, 64], sizes = [8, 32], strides = [1, 1]} : vector<8x128xf32> to vector<8x32xf32>
    %258 = vector.extract_strided_slice %253 {offsets = [0, 96], sizes = [8, 32], strides = [1, 1]} : vector<8x128xf32> to vector<8x32xf32>
    %259 = arith.mulf %256, %242 : vector<8x32xf32>
    %260 = arith.mulf %255, %257 : vector<8x32xf32>
    %261 = arith.addf %259, %260 : vector<8x32xf32>
    %262 = math.tanh %261 : vector<8x32xf32>
    %263 = arith.mulf %258, %262 : vector<8x32xf32>
    %c0_27 = arith.constant 0 : index
    %c0_28 = arith.constant 0 : index
    %264 = vector.load %arg5[%c0_27, %c0_28] : memref<32x128xf32, #tpu.memory_space<vmem>>, vector<32x128xf32>
    %cst_29 = arith.constant dense<0.000000e+00> : vector<8x128xf32>
    %265 = tpu.matmul %263, %264, %cst_29 {dimension_numbers = #tpu.dot_dimension_numbers<[1], [0], [0], [1], [0, 0, 1, 1], [], []>} : vector<8x32xf32>, vector<32x128xf32>, vector<8x128xf32> -> vector<8x128xf32>
    %c0_30 = arith.constant 0 : index
    %c0_31 = arith.constant 0 : index
    %266 = vector.load %arg6[%c0_30, %c0_31] : memref<1x128xf32, #tpu.memory_space<vmem>>, vector<1x128xf32>
    %267 = vector.broadcast %266 : vector<1x128xf32> to vector<8x128xf32>
    %268 = arith.addf %265, %267 : vector<8x128xf32>
    %c0_32 = arith.constant 0 : index
    %c0_33 = arith.constant 0 : index
    %269 = vector.load %arg7[%c0_32, %c0_33] : memref<128x128xf32, #tpu.memory_space<vmem>>, vector<128x128xf32>
    %cst_34 = arith.constant dense<0.000000e+00> : vector<8x128xf32>
    %270 = tpu.matmul %268, %269, %cst_34 {dimension_numbers = #tpu.dot_dimension_numbers<[1], [0], [0], [1], [0, 0, 1, 1], [], []>} : vector<8x128xf32>, vector<128x128xf32>, vector<8x128xf32> -> vector<8x128xf32>
    %c0_35 = arith.constant 0 : index
    %c0_36 = arith.constant 0 : index
    %271 = vector.load %arg8[%c0_35, %c0_36] : memref<1x128xf32, #tpu.memory_space<vmem>>, vector<1x128xf32>
    %272 = vector.broadcast %271 : vector<1x128xf32> to vector<8x128xf32>
    %273 = arith.addf %270, %272 : vector<8x128xf32>
    %c0_37 = arith.constant 0 : index
    %c0_38 = arith.constant 0 : index
    %274 = vector.load %arg9[%c0_37, %c0_38] : memref<8x128xf32, #tpu.memory_space<vmem>>, vector<8x128xf32>
    tpu.vector_store %arg9[%c0_37, %c0_38], %273 {strides = array<i32>} : memref<8x128xf32, #tpu.memory_space<vmem>>, vector<8x128xf32>,
    return
  }
}

</mosaic_0001>

<llo_original>
// kernel: pure_lstm_forward.1
$region0: #{pure_lstm_forward.1}
  #allocation0 [shape = 'u32[]', space=smem, size = 0x4, offset = 0x4, fixed_abs, tag = 'smem constant byte address 0x4 - core index']
  #allocation1 [shape = 'u32[72,128]{1,0:T(1,128)}', space=vmem, size = 0x9000, scoped, tag = 'internal scratch']
  %s0 = inlined_call_operand.vmem [shape: f32[64,4], index: 0, kind: input, shape index: {}]
  %s1 = inlined_call_operand.vmem [shape: f32[4,128], index: 1, kind: input, shape index: {}]
  %s2 = inlined_call_operand.vmem [shape: f32[1,128], index: 2, kind: input, shape index: {}]
  %s3 = inlined_call_operand.vmem [shape: bf16[64,256], index: 3, kind: input, shape index: {}]
  %s4 = inlined_call_operand.vmem [shape: f32[1,128], index: 4, kind: input, shape index: {}]
  %s5 = inlined_call_operand.vmem [shape: f32[32,128], index: 5, kind: input, shape index: {}]
  %s6 = inlined_call_operand.vmem [shape: f32[1,128], index: 6, kind: input, shape index: {}]
  %s7 = inlined_call_operand.hbm [shape: f32[128,128], index: 7, kind: input, shape index: {}]
  %s8 = inlined_call_operand.vmem [shape: f32[1,128], index: 8, kind: input, shape index: {}]
  %s9 = inlined_call_operand.hbm [shape: f32[8,128], index: 9, kind: output, shape index: {}]
  %s10 = sld [smem:[#allocation0]]
  $region50: #{pure_lstm_forward.1} parent=0
    _
  %s12 = ssub.s32 1, %s10
  %s13 = scalar_select 0, %s12, %s10
  $region1: #{pure_lstm_forward.1} parent=0
    #allocation2 [shape = 'u8[65536]{0}', space=vmem, size = 0x10000, scoped, tag = 'input window, operand 7, single buffered']
    #allocation3 [shape = 's32[1]{0}', space=sflag, size = 0x4, scoped, tag = 'scoped memory for pure_lstm_forward.1']
    #allocation4 [shape = 's32[1]{0}', space=sflag, size = 0x4, scoped, tag = 'scoped memory for pure_lstm_forward.1']
    #allocation5 [shape = 'u8[4096]{0}', space=vmem, size = 0x1000, scoped, tag = 'output window, operand 0, single buffered']
    %14 = vsyncpa [#allocation3], 0
    %15 = vsyncpa [#allocation4], 0
    // Predicated region
    $region2: #{pure_lstm_forward.1} parent=1 // pred_check
      _
    $region3: #{pure_lstm_forward.1} parent=1 // pred_check_branch
      %17 = sbr.rel (0) target = $region5
    $region4: #{pure_lstm_forward.1} parent=1 // pred_region
      _
    $region5: #{pure_lstm_forward.1} parent=1 // pred_fallthru
      _
    // Predicated region
    $region6: #{pure_lstm_forward.1} parent=1 // pred_check
      _
    $region7: #{pure_lstm_forward.1} parent=1 // pred_check_branch
      %19 = sbr.rel (0) target = $region9
    $region8: #{pure_lstm_forward.1} parent=1 // pred_region
      _
    $region9: #{pure_lstm_forward.1} parent=1 // pred_fallthru
      _
    // Predicated region
    $region10: #{pure_lstm_forward.1} parent=1 // pred_check
      _
    $region11: #{pure_lstm_forward.1} parent=1 // pred_check_branch
      %21 = sbr.rel (0) target = $region13
    $region12: #{pure_lstm_forward.1} parent=1 // pred_region
      _
    $region13: #{pure_lstm_forward.1} parent=1 // pred_fallthru
      _
    // Predicated region
    $region14: #{pure_lstm_forward.1} parent=1 // pred_check
      _
    $region15: #{pure_lstm_forward.1} parent=1 // pred_check_branch
      %23 = sbr.rel (0) target = $region17
    $region16: #{pure_lstm_forward.1} parent=1 // pred_region
      _
    $region17: #{pure_lstm_forward.1} parent=1 // pred_fallthru
      _
    // Predicated region
    $region18: #{pure_lstm_forward.1} parent=1 // pred_check
      _
    $region19: #{pure_lstm_forward.1} parent=1 // pred_check_branch
      %25 = sbr.rel (0) target = $region21
    $region20: #{pure_lstm_forward.1} parent=1 // pred_region
      _
    $region21: #{pure_lstm_forward.1} parent=1 // pred_fallthru
      _
    // Predicated region
    $region22: #{pure_lstm_forward.1} parent=1 // pred_check
      _
    $region23: #{pure_lstm_forward.1} parent=1 // pred_check_branch
      %27 = sbr.rel (0) target = $region25
    $region24: #{pure_lstm_forward.1} parent=1 // pred_region
      _
    $region25: #{pure_lstm_forward.1} parent=1 // pred_fallthru
      _
    // Predicated region
    $region26: #{pure_lstm_forward.1} parent=1 // pred_check
      _
    $region27: #{pure_lstm_forward.1} parent=1 // pred_check_branch
      %29 = sbr.rel (0) target = $region29
    $region28: #{pure_lstm_forward.1} parent=1 // pred_region
      _
    $region29: #{pure_lstm_forward.1} parent=1 // pred_fallthru
      _
    // Predicated region
    $region30: #{pure_lstm_forward.1} parent=1 // pred_check
      _
    $region31: #{pure_lstm_forward.1} parent=1 // pred_check_branch
      %31 = sbr.rel (0) target = $region33
    $region32: #{pure_lstm_forward.1} parent=1 // pred_region
      %33 = vsyncadd [#allocation3], 0
      %s34 = sshll.u32 %s7, 4
      %s35 = int_to_ptr.hbm [resolvable:$true] %s34
      %s36 = sshll.u32 [#allocation2], 4
      %s37 = int_to_ptr.vmem [resolvable:$true] %s36
      %42 = dma.hbm_to_vmem [thread:$0]  %s35, 2048, %s37, [#allocation3], 128, 128, 8
    $region33: #{pure_lstm_forward.1} parent=1 // pred_fallthru
      _
    // Predicated region
    $region34: #{pure_lstm_forward.1} parent=1 // pred_check
      _
    $region35: #{pure_lstm_forward.1} parent=1 // pred_check_branch
      %44 = sbr.rel (0) target = $region37
    $region36: #{pure_lstm_forward.1} parent=1 // pred_region
      _
    $region37: #{pure_lstm_forward.1} parent=1 // pred_fallthru
      _
    // Predicated region
    $region38: #{pure_lstm_forward.1} parent=1 // pred_check
      _
    $region39: #{pure_lstm_forward.1} parent=1 // pred_check_branch
      %46 = sbr.rel (0) target = $region41
    $region40: #{pure_lstm_forward.1} parent=1 // pred_region
      %48 = dma.done [#allocation3], 2048
    $region41: #{pure_lstm_forward.1} parent=1 // pred_fallthru
      _
    %v50 = vld [vmem:[%s0] sm:$0xff]
    %v51 = vld [vmem:[%s0 + $0x8] sm:$0xff]
    %v52 = vld [vmem:[%s0 + $0x10] sm:$0xff]
    %v53 = vld [vmem:[%s0 + $0x18] sm:$0xff]
    %v54 = vld [vmem:[%s0 + $0x20] sm:$0xff]
    %v55 = vld [vmem:[%s0 + $0x28] sm:$0xff]
    %v56 = vld [vmem:[%s0 + $0x30] sm:$0xff]
    %v57 = vld [vmem:[%s0 + $0x38] sm:$0xff]
    %v58 = vld [vmem:[%s1] sm:$0xf]
    %v59 = vld [vmem:[%s2] sm:$0x1]
    %v61 = vperm.slane %v59, 0
    %vm63 = vcmask 31744
    %v65 = vsel %vm63, %v50, 0
    %v68 = vsel %vm63, %v51, 0
    %v71 = vsel %vm63, %v52, 0
    %v74 = vsel %vm63, %v53, 0
    %v77 = vsel %vm63, %v54, 0
    %v80 = vsel %vm63, %v55, 0
    %v83 = vsel %vm63, %v56, 0
    %v86 = vsel %vm63, %v57, 0
    %vm88 = vcmask 1043456
    %v90 = vsel %vm88, %v58, 0
    %92 = vmatpush.msra.mxu0 0.0
    %93 = vmatpush.msra.mxu0 0.0
    %94 = vmatpush.msra.mxu0 0.0
    %95 = vmatpush.msra.mxu0 0.0
    %96 = vmatpush.msra.mxu0 0.0
    %97 = vmatpush.msra.mxu0 0.0
    %98 = vmatpush.msra.mxu0 0.0
    %99 = vmatpush.msra.mxu0 0.0
    %100 = vmatpush.msra.mxu0 0.0
    %101 = vmatpush.msra.mxu0 0.0
    %102 = vmatpush.msra.mxu0 0.0
    %103 = vmatpush.msra.mxu0 0.0
    %104 = vmatpush.msra.mxu0 0.0
    %105 = vmatpush.msra.mxu0 0.0
    %106 = vmatpush.msra.mxu0 0.0
    %107 = vmatpush.msra.mxu0 %v90
    %108 = vmatmul.f32.gmra.mxu0 %v65
    %v109 = vpop.f32.mrf.mxu0
    %v110 = vadd.f32 %v61, %v109
    %111 = vmatmul.f32.gmra.mxu0 %v68
    %v112 = vpop.f32.mrf.mxu0
    %v113 = vadd.f32 %v61, %v112
    %114 = vmatmul.f32.gmra.mxu0 %v71
    %v115 = vpop.f32.mrf.mxu0
    %v116 = vadd.f32 %v61, %v115
    %117 = vmatmul.f32.gmra.mxu0 %v74
    %v118 = vpop.f32.mrf.mxu0
    %v119 = vadd.f32 %v61, %v118
    %120 = vmatmul.f32.gmra.mxu0 %v77
    %v121 = vpop.f32.mrf.mxu0
    %v122 = vadd.f32 %v61, %v121
    %123 = vmatmul.f32.gmra.mxu0 %v80
    %v124 = vpop.f32.mrf.mxu0
    %v125 = vadd.f32 %v61, %v124
    %126 = vmatmul.f32.gmra.mxu0 %v83
    %v127 = vpop.f32.mrf.mxu0
    %v128 = vadd.f32 %v61, %v127
    %129 = vmatmul.f32.gmra.mxu0 %v86
    %v130 = vpop.f32.mrf.mxu0
    %v131 = vadd.f32 %v61, %v130
    %132 = vdwg.mxu0
    %v133 = vld [vmem:[%s3] sm:$0xff]
    %v134 = vld [vmem:[%s3 + $0x8] sm:$0xff]
    %v135 = vld [vmem:[%s3 + $0x10] sm:$0xff]
    %v136 = vld [vmem:[%s3 + $0x18] sm:$0xff]
    %v137 = vld [vmem:[%s3 + $0x20] sm:$0xff]
    %v138 = vld [vmem:[%s3 + $0x28] sm:$0xff]
    %v139 = vld [vmem:[%s3 + $0x30] sm:$0xff]
    %v140 = vld [vmem:[%s3 + $0x38] sm:$0xff]
    %v141 = vld [vmem:[%s4] sm:$0x1]
    %v142 = vxor.u32 %v110, 2147483648
    %v143 = vxor.u32 %v113, 2147483648
    %v144 = vxor.u32 %v116, 2147483648
    %v145 = vxor.u32 %v119, 2147483648
    %v146 = vxor.u32 %v122, 2147483648
    %v147 = vxor.u32 %v125, 2147483648
    %v148 = vxor.u32 %v128, 2147483648
    %v149 = vxor.u32 %v131, 2147483648
    %v150 = vmul.f32 %v142, 1.442695
    %v151 = vpow.pop %v150
    %v152 = vmul.f32 %v143, 1.442695
    %v153 = vpow.pop %v152
    %v154 = vmul.f32 %v144, 1.442695
    %v155 = vpow.pop %v154
    %v156 = vmul.f32 %v145, 1.442695
    %v157 = vpow.pop %v156
    %v158 = vmul.f32 %v146, 1.442695
    %v159 = vpow.pop %v158
    %v160 = vmul.f32 %v147, 1.442695
    %v161 = vpow.pop %v160
    %v162 = vmul.f32 %v148, 1.442695
    %v163 = vpow.pop %v162
    %v164 = vmul.f32 %v149, 1.442695
    %v165 = vpow.pop %v164
    %v166 = vadd.f32 %v151, 1.0
    %v167 = vadd.f32 %v153, 1.0
    %v168 = vadd.f32 %v155, 1.0
    %v169 = vadd.f32 %v157, 1.0
    %v170 = vadd.f32 %v159, 1.0
    %v171 = vadd.f32 %v161, 1.0
    %v172 = vadd.f32 %v163, 1.0
    %v173 = vadd.f32 %v165, 1.0
    %v174 = vrcp.pop %v166
    %v175 = vmul.f32 %v166, %v174
    %v176 = vsub.f32 1.0, %v175
    %v177 = vmul.f32 %v174, %v176
    %v178 = vadd.f32 %v174, %v177
    %vm179 = vweird.f32 %v166
    %vm180 = vweird.f32 %v174
    %vm181 = vmor %vm179, %vm180
    %v182 = vsel %vm181, %v174, %v178
    %v183 = vand.u32 2147483647, %v166
    %vm184 = vcmp.eq.f32.partialorder %v183, 8.507059e+37
    %v185 = vand.u32 %v166, 2147483648
    %v186 = vor.u32 1.1754944e-38, %v185
    %v187 = vsel %vm184, %v186, %v182
    %v188 = vmul.f32 1.0, %v187
    %v189 = vrcp.pop %v167
    %v190 = vmul.f32 %v167, %v189
    %v191 = vsub.f32 1.0, %v190
    %v192 = vmul.f32 %v189, %v191
    %v193 = vadd.f32 %v189, %v192
    %vm194 = vweird.f32 %v167
    %vm195 = vweird.f32 %v189
    %vm196 = vmor %vm194, %vm195
    %v197 = vsel %vm196, %v189, %v193
    %v198 = vand.u32 2147483647, %v167
    %vm199 = vcmp.eq.f32.partialorder %v198, 8.507059e+37
    %v200 = vand.u32 %v167, 2147483648
    %v201 = vor.u32 1.1754944e-38, %v200
    %v202 = vsel %vm199, %v201, %v197
    %v203 = vmul.f32 1.0, %v202
    %v204 = vrcp.pop %v168
    %v205 = vmul.f32 %v168, %v204
    %v206 = vsub.f32 1.0, %v205
    %v207 = vmul.f32 %v204, %v206
    %v208 = vadd.f32 %v204, %v207
    %vm209 = vweird.f32 %v168
    %vm210 = vweird.f32 %v204
    %vm211 = vmor %vm209, %vm210
    %v212 = vsel %vm211, %v204, %v208
    %v213 = vand.u32 2147483647, %v168
    %vm214 = vcmp.eq.f32.partialorder %v213, 8.507059e+37
    %v215 = vand.u32 %v168, 2147483648
    %v216 = vor.u32 1.1754944e-38, %v215
    %v217 = vsel %vm214, %v216, %v212
    %v218 = vmul.f32 1.0, %v217
    %v219 = vrcp.pop %v169
    %v220 = vmul.f32 %v169, %v219
    %v221 = vsub.f32 1.0, %v220
    %v222 = vmul.f32 %v219, %v221
    %v223 = vadd.f32 %v219, %v222
    %vm224 = vweird.f32 %v169
    %vm225 = vweird.f32 %v219
    %vm226 = vmor %vm224, %vm225
    %v227 = vsel %vm226, %v219, %v223
    %v228 = vand.u32 2147483647, %v169
    %vm229 = vcmp.eq.f32.partialorder %v228, 8.507059e+37
    %v230 = vand.u32 %v169, 2147483648
    %v231 = vor.u32 1.1754944e-38, %v230
    %v232 = vsel %vm229, %v231, %v227
    %v233 = vmul.f32 1.0, %v232
    %v234 = vrcp.pop %v170
    %v235 = vmul.f32 %v170, %v234
    %v236 = vsub.f32 1.0, %v235
    %v237 = vmul.f32 %v234, %v236
    %v238 = vadd.f32 %v234, %v237
    %vm239 = vweird.f32 %v170
    %vm240 = vweird.f32 %v234
    %vm241 = vmor %vm239, %vm240
    %v242 = vsel %vm241, %v234, %v238
    %v243 = vand.u32 2147483647, %v170
    %vm244 = vcmp.eq.f32.partialorder %v243, 8.507059e+37
    %v245 = vand.u32 %v170, 2147483648
    %v246 = vor.u32 1.1754944e-38, %v245
    %v247 = vsel %vm244, %v246, %v242
    %v248 = vmul.f32 1.0, %v247
    %v249 = vrcp.pop %v171
    %v250 = vmul.f32 %v171, %v249
    %v251 = vsub.f32 1.0, %v250
    %v252 = vmul.f32 %v249, %v251
    %v253 = vadd.f32 %v249, %v252
    %vm254 = vweird.f32 %v171
    %vm255 = vweird.f32 %v249
    %vm256 = vmor %vm254, %vm255
    %v257 = vsel %vm256, %v249, %v253
    %v258 = vand.u32 2147483647, %v171
    %vm259 = vcmp.eq.f32.partialorder %v258, 8.507059e+37
    %v260 = vand.u32 %v171, 2147483648
    %v261 = vor.u32 1.1754944e-38, %v260
    %v262 = vsel %vm259, %v261, %v257
    %v263 = vmul.f32 1.0, %v262
    %v264 = vrcp.pop %v172
    %v265 = vmul.f32 %v172, %v264
    %v266 = vsub.f32 1.0, %v265
    %v267 = vmul.f32 %v264, %v266
    %v268 = vadd.f32 %v264, %v267
    %vm269 = vweird.f32 %v172
    %vm270 = vweird.f32 %v264
    %vm271 = vmor %vm269, %vm270
    %v272 = vsel %vm271, %v264, %v268
    %v273 = vand.u32 2147483647, %v172
    %vm274 = vcmp.eq.f32.partialorder %v273, 8.507059e+37
    %v275 = vand.u32 %v172, 2147483648
    %v276 = vor.u32 1.1754944e-38, %v275
    %v277 = vsel %vm274, %v276, %v272
    %v278 = vmul.f32 1.0, %v277
    %v279 = vrcp.pop %v173
    %v280 = vmul.f32 %v173, %v279
    %v281 = vsub.f32 1.0, %v280
    %v282 = vmul.f32 %v279, %v281
    %v283 = vadd.f32 %v279, %v282
    %vm284 = vweird.f32 %v173
    %vm285 = vweird.f32 %v279
    %vm286 = vmor %vm284, %vm285
    %v287 = vsel %vm286, %v279, %v283
    %v288 = vand.u32 2147483647, %v173
    %vm289 = vcmp.eq.f32.partialorder %v288, 8.507059e+37
    %v290 = vand.u32 %v173, 2147483648
    %v291 = vor.u32 1.1754944e-38, %v290
    %v292 = vsel %vm289, %v291, %v287
    %v293 = vmul.f32 1.0, %v292
    %v294 = vtanh.pop %v110
    %v295 = vtanh.pop %v113
    %v296 = vtanh.pop %v116
    %v297 = vtanh.pop %v119
    %v298 = vtanh.pop %v122
    %v299 = vtanh.pop %v125
    %v300 = vtanh.pop %v128
    %v301 = vtanh.pop %v131
    %v302 = vmul.f32 %v188, 0.0
    %v303 = vmul.f32 %v203, 0.0
    %v304 = vmul.f32 %v218, 0.0
    %v305 = vmul.f32 %v233, 0.0
    %v306 = vmul.f32 %v248, 0.0
    %v307 = vmul.f32 %v263, 0.0
    %v308 = vmul.f32 %v278, 0.0
    %v309 = vmul.f32 %v293, 0.0
    %318 = vrot.lane.b32.xlu0 %v294, 64
    %v319 = vpop.permute.xlu0 %318
    %320 = vrot.lane.b32.xlu0 %v295, 64
    %v321 = vpop.permute.xlu0 %320
    %322 = vrot.lane.b32.xlu0 %v296, 64
    %v323 = vpop.permute.xlu0 %322
    %324 = vrot.lane.b32.xlu0 %v297, 64
    %v325 = vpop.permute.xlu0 %324
    %326 = vrot.lane.b32.xlu0 %v298, 64
    %v327 = vpop.permute.xlu0 %326
    %328 = vrot.lane.b32.xlu0 %v299, 64
    %v329 = vpop.permute.xlu0 %328
    %330 = vrot.lane.b32.xlu0 %v300, 64
    %v331 = vpop.permute.xlu0 %330
    %332 = vrot.lane.b32.xlu0 %v301, 64
    %v333 = vpop.permute.xlu0 %332
    %v342 = vmul.f32 %v188, %v319
    %v343 = vmul.f32 %v203, %v321
    %v344 = vmul.f32 %v218, %v323
    %v345 = vmul.f32 %v233, %v325
    %v346 = vmul.f32 %v248, %v327
    %v347 = vmul.f32 %v263, %v329
    %v348 = vmul.f32 %v278, %v331
    %v349 = vmul.f32 %v293, %v333
    %358 = vrot.lane.b32.xlu0 %v342, 32
    %v359 = vpop.permute.xlu0 %358
    %360 = vrot.lane.b32.xlu0 %v343, 32
    %v361 = vpop.permute.xlu0 %360
    %362 = vrot.lane.b32.xlu0 %v344, 32
    %v363 = vpop.permute.xlu0 %362
    %364 = vrot.lane.b32.xlu0 %v345, 32
    %v365 = vpop.permute.xlu0 %364
    %366 = vrot.lane.b32.xlu0 %v346, 32
    %v367 = vpop.permute.xlu0 %366
    %368 = vrot.lane.b32.xlu0 %v347, 32
    %v369 = vpop.permute.xlu0 %368
    %370 = vrot.lane.b32.xlu0 %v348, 32
    %v371 = vpop.permute.xlu0 %370
    %372 = vrot.lane.b32.xlu0 %v349, 32
    %v373 = vpop.permute.xlu0 %372
    %v382 = vadd.f32 %v302, %v359
    %v383 = vadd.f32 %v303, %v361
    %v384 = vadd.f32 %v304, %v363
    %v385 = vadd.f32 %v305, %v365
    %v386 = vadd.f32 %v306, %v367
    %v387 = vadd.f32 %v307, %v369
    %v388 = vadd.f32 %v308, %v371
    %v389 = vadd.f32 %v309, %v373
    %v390 = vtanh.pop %v382
    %v391 = vtanh.pop %v383
    %v392 = vtanh.pop %v384
    %v393 = vtanh.pop %v385
    %v394 = vtanh.pop %v386
    %v395 = vtanh.pop %v387
    %v396 = vtanh.pop %v388
    %v397 = vtanh.pop %v389
    %406 = vrot.lane.b32.xlu0 %v390, 64
    %v407 = vpop.permute.xlu0 %406
    %408 = vrot.lane.b32.xlu0 %v391, 64
    %v409 = vpop.permute.xlu0 %408
    %410 = vrot.lane.b32.xlu0 %v392, 64
    %v411 = vpop.permute.xlu0 %410
    %412 = vrot.lane.b32.xlu0 %v393, 64
    %v413 = vpop.permute.xlu0 %412
    %414 = vrot.lane.b32.xlu0 %v394, 64
    %v415 = vpop.permute.xlu0 %414
    %416 = vrot.lane.b32.xlu0 %v395, 64
    %v417 = vpop.permute.xlu0 %416
    %418 = vrot.lane.b32.xlu0 %v396, 64
    %v419 = vpop.permute.xlu0 %418
    %420 = vrot.lane.b32.xlu0 %v397, 64
    %v421 = vpop.permute.xlu0 %420
    %v430 = vmul.f32 %v188, %v407
    %v431 = vmul.f32 %v203, %v409
    %v432 = vmul.f32 %v218, %v411
    %v433 = vmul.f32 %v233, %v413
    %v434 = vmul.f32 %v248, %v415
    %v435 = vmul.f32 %v263, %v417
    %v436 = vmul.f32 %v278, %v419
    %v437 = vmul.f32 %v293, %v421
    %v446 = vrot.slane %v431, 7
    %vm447 = vcmask 1041409
    %v448 = vsel %vm447, %v446, %v430
    %v449 = vrot.slane %v432, 6
    %vm450 = vcmask 1042434
    %v451 = vsel %vm450, %v449, %v448
    %v452 = vrot.slane %v433, 5
    %vm453 = vcmask 1043459
    %v454 = vsel %vm453, %v452, %v451
    %v455 = vrot.slane %v434, 4
    %vm456 = vcmask 1044484
    %v457 = vsel %vm456, %v455, %v454
    %v458 = vrot.slane %v435, 3
    %vm459 = vcmask 1045509
    %v460 = vsel %vm459, %v458, %v457
    %v461 = vrot.slane %v436, 2
    %vm462 = vcmask 1046534
    %v463 = vsel %vm462, %v461, %v460
    %v464 = vrot.slane %v437, 1
    %vm465 = vcmask 1047559
    %v466 = vsel %vm465, %v464, %v463
    %467 = vrot.lane.b32.xlu0 %v466, 32
    %v468 = vpop.permute.xlu0 %467
    %vm470 = vcmask 261120
    %v471 = vsel %vm470, %v468, 0.0
    %v472 = vpack.c.bf16 %v471, %v471
    %v481 = vunpack.c.l.b16 %v133
    %v482 = vunpack.c.h.b16 %v133
    %v483 = vunpack.c.l.b16 %v134
    %v484 = vunpack.c.h.b16 %v134
    %v485 = vunpack.c.l.b16 %v135
    %v486 = vunpack.c.h.b16 %v135
    %v487 = vunpack.c.l.b16 %v136
    %v488 = vunpack.c.h.b16 %v136
    %v489 = vunpack.c.l.b16 %v137
    %v490 = vunpack.c.h.b16 %v137
    %v491 = vunpack.c.l.b16 %v138
    %v492 = vunpack.c.h.b16 %v138
    %v493 = vunpack.c.l.b16 %v139
    %v494 = vunpack.c.h.b16 %v139
    %v495 = vunpack.c.l.b16 %v140
    %v496 = vunpack.c.h.b16 %v140
    %v497 = vpack.c.b16 %v483, %v481
    %v498 = vpack.c.b16 %v484, %v482
    %v499 = vpack.c.b16 %v487, %v485
    %v500 = vpack.c.b16 %v488, %v486
    %v501 = vpack.c.b16 %v491, %v489
    %v502 = vpack.c.b16 %v492, %v490
    %v503 = vpack.c.b16 %v495, %v493
    %v504 = vpack.c.b16 %v496, %v494
    %vm513 = vcmask 523264
    %v515 = vsel %vm513, %v472, 0
    %517 = vmatpush.bf16.msra.mxu0 0
    %518 = vmatpush.bf16.msra.mxu0 0
    %519 = vmatpush.bf16.msra.mxu0 0
    %520 = vmatpush.bf16.msra.mxu0 0
    %521 = vmatpush.bf16.msra.mxu0 %v503
    %522 = vmatpush.bf16.msra.mxu0 %v501
    %523 = vmatpush.bf16.msra.mxu0 %v499
    %524 = vmatpush.bf16.msra.mxu0 %v497
    %525 = vmatmul.bf16.gmra.mxu0 %v515
    %v526 = vpop.f32.mrf.mxu0
    %v527 = vadd.f32 0.0, %v526
    %v528 = vpop.f32.mrf.mxu0
    %529 = vdwg.mxu0
    %530 = vmatpush.bf16.msra.mxu0 0
    %531 = vmatpush.bf16.msra.mxu0 0
    %532 = vmatpush.bf16.msra.mxu0 0
    %533 = vmatpush.bf16.msra.mxu0 0
    %534 = vmatpush.bf16.msra.mxu0 %v504
    %535 = vmatpush.bf16.msra.mxu0 %v502
    %536 = vmatpush.bf16.msra.mxu0 %v500
    %537 = vmatpush.bf16.msra.mxu0 %v498
    %538 = vmatmul.bf16.gmra.mxu0 %v515
    %v539 = vpop.f32.mrf.mxu0
    %v540 = vadd.f32 0.0, %v539
    %v541 = vpop.f32.mrf.mxu0
    %542 = vdwg.mxu0
    %v544 = vrot.slane %v527, 7
    %v545 = vrot.slane %v527, 1
    %v546 = vrot.slane %v527, 2
    %v547 = vrot.slane %v527, 3
    %v548 = vrot.slane %v527, 4
    %v549 = vrot.slane %v527, 5
    %v550 = vrot.slane %v527, 6
    %v559 = vadd.f32 %v110, %v544
    %v560 = vadd.f32 %v113, %v527
    %v561 = vadd.f32 %v116, %v545
    %v562 = vadd.f32 %v119, %v546
    %v563 = vadd.f32 %v122, %v547
    %v564 = vadd.f32 %v125, %v548
    %v565 = vadd.f32 %v128, %v549
    %v566 = vadd.f32 %v131, %v550
    %v568 = vperm.slane %v141, 0
    %v570 = vadd.f32 %v540, %v568
    %v579 = vrot.slane %v559, 1
    %v580 = vsel %vm447, %v560, %v579
    %v581 = vrot.slane %v561, 7
    %v582 = vsel %vm450, %v581, %v580
    %v583 = vrot.slane %v562, 6
    %v584 = vsel %vm453, %v583, %v582
    %v585 = vrot.slane %v563, 5
    %v586 = vsel %vm456, %v585, %v584
    %v587 = vrot.slane %v564, 4
    %v588 = vsel %vm459, %v587, %v586
    %v589 = vrot.slane %v565, 3
    %v590 = vsel %vm462, %v589, %v588
    %v591 = vrot.slane %v566, 2
    %v592 = vsel %vm465, %v591, %v590
    %v602 = vrot.slane %v383, 7
    %v603 = vsel %vm447, %v602, %v382
    %v604 = vrot.slane %v384, 6
    %v605 = vsel %vm450, %v604, %v603
    %v606 = vrot.slane %v385, 5
    %v607 = vsel %vm453, %v606, %v605
    %v608 = vrot.slane %v386, 4
    %v609 = vsel %vm456, %v608, %v607
    %v610 = vrot.slane %v387, 3
    %v611 = vsel %vm459, %v610, %v609
    %v612 = vrot.slane %v388, 2
    %v613 = vsel %vm462, %v612, %v611
    %v614 = vrot.slane %v389, 1
    %v615 = vsel %vm465, %v614, %v613
    %v617 = vxor.u32 %v592, 2147483648
    %v618 = vxor.u32 %v570, 2147483648
    %v619 = vmul.f32 %v617, 1.442695
    %v620 = vpow.pop %v619
    %v621 = vmul.f32 %v618, 1.442695
    %v622 = vpow.pop %v621
    %v623 = vadd.f32 %v620, 1.0
    %v624 = vadd.f32 %v622, 1.0
    %v625 = vrcp.pop %v623
    %v626 = vmul.f32 %v623, %v625
    %v627 = vsub.f32 1.0, %v626
    %v628 = vmul.f32 %v625, %v627
    %v629 = vadd.f32 %v625, %v628
    %vm630 = vweird.f32 %v623
    %vm631 = vweird.f32 %v625
    %vm632 = vmor %vm630, %vm631
    %v633 = vsel %vm632, %v625, %v629
    %v634 = vand.u32 2147483647, %v623
    %vm635 = vcmp.eq.f32.partialorder %v634, 8.507059e+37
    %v636 = vand.u32 %v623, 2147483648
    %v637 = vor.u32 1.1754944e-38, %v636
    %v638 = vsel %vm635, %v637, %v633
    %v639 = vmul.f32 1.0, %v638
    %v640 = vrcp.pop %v624
    %v641 = vmul.f32 %v624, %v640
    %v642 = vsub.f32 1.0, %v641
    %v643 = vmul.f32 %v640, %v642
    %v644 = vadd.f32 %v640, %v643
    %vm645 = vweird.f32 %v624
    %vm646 = vweird.f32 %v640
    %vm647 = vmor %vm645, %vm646
    %v648 = vsel %vm647, %v640, %v644
    %v649 = vand.u32 2147483647, %v624
    %vm650 = vcmp.eq.f32.partialorder %v649, 8.507059e+37
    %v651 = vand.u32 %v624, 2147483648
    %v652 = vor.u32 1.1754944e-38, %v651
    %v653 = vsel %vm650, %v652, %v648
    %v654 = vmul.f32 1.0, %v653
    %v655 = vtanh.pop %v592
    %v656 = vtanh.pop %v570
    %v657 = vmul.f32 %v639, %v615
    %v658 = vmul.f32 %v654, 0.0
    %661 = vrot.lane.b32.xlu0 %v655, 64
    %v662 = vpop.permute.xlu0 %661
    %663 = vrot.lane.b32.xlu0 %v656, 64
    %v664 = vpop.permute.xlu0 %663
    %v667 = vmul.f32 %v639, %v662
    %v668 = vmul.f32 %v654, %v664
    %671 = vrot.lane.b32.xlu0 %v667, 32
    %v672 = vpop.permute.xlu0 %671
    %673 = vrot.lane.b32.xlu0 %v668, 32
    %v674 = vpop.permute.xlu0 %673
    %v677 = vadd.f32 %v657, %v672
    %v678 = vadd.f32 %v658, %v674
    %v679 = vtanh.pop %v677
    %v680 = vtanh.pop %v678
    %683 = vrot.lane.b32.xlu0 %v679, 64
    %v684 = vpop.permute.xlu0 %683
    %685 = vrot.lane.b32.xlu0 %v680, 64
    %v686 = vpop.permute.xlu0 %685
    %v689 = vmul.f32 %v639, %v684
    %v690 = vmul.f32 %v654, %v686
    %692 = vrot.lane.b32.xlu0 %v689, 32
    %v693 = vpop.permute.xlu0 %692
    %696 = vrot.lane.b32.xlu0 %v690, 64
    %v697 = vpop.permute.xlu0 %696
    %v699 = vsel %vm470, %v693, %v697
    %v700 = vpack.c.bf16 %v699, %v699
    %v702 = vsel %vm513, %v700, 0
    %704 = vmatpush.bf16.msra.mxu0 0
    %705 = vmatpush.bf16.msra.mxu0 0
    %706 = vmatpush.bf16.msra.mxu0 0
    %707 = vmatpush.bf16.msra.mxu0 0
    %708 = vmatpush.bf16.msra.mxu0 %v503
    %709 = vmatpush.bf16.msra.mxu0 %v501
    %710 = vmatpush.bf16.msra.mxu0 %v499
    %711 = vmatpush.bf16.msra.mxu0 %v497
    %712 = vmatmul.bf16.gmra.mxu0 %v702
    %v713 = vpop.f32.mrf.mxu0
    %v714 = vadd.f32 0.0, %v713
    %v715 = vpop.f32.mrf.mxu0
    %716 = vdwg.mxu0
    %717 = vmatpush.bf16.msra.mxu0 0
    %718 = vmatpush.bf16.msra.mxu0 0
    %719 = vmatpush.bf16.msra.mxu0 0
    %720 = vmatpush.bf16.msra.mxu0 0
    %721 = vmatpush.bf16.msra.mxu0 %v504
    %722 = vmatpush.bf16.msra.mxu0 %v502
    %723 = vmatpush.bf16.msra.mxu0 %v500
    %724 = vmatpush.bf16.msra.mxu0 %v498
    %725 = vmatmul.bf16.gmra.mxu0 %v702
    %v726 = vpop.f32.mrf.mxu0
    %v727 = vadd.f32 0.0, %v726
    %v728 = vpop.f32.mrf.mxu0
    %729 = vdwg.mxu0
    %v731 = vrot.slane %v714, 6
    %v732 = vrot.slane %v714, 7
    %v733 = vrot.slane %v714, 1
    %v734 = vrot.slane %v714, 2
    %v735 = vrot.slane %v714, 3
    %v736 = vrot.slane %v714, 4
    %v737 = vrot.slane %v714, 5
    %v746 = vadd.f32 %v110, %v731
    %v747 = vadd.f32 %v113, %v732
    %v748 = vadd.f32 %v116, %v714
    %v749 = vadd.f32 %v119, %v733
    %v750 = vadd.f32 %v122, %v734
    %v751 = vadd.f32 %v125, %v735
    %v752 = vadd.f32 %v128, %v736
    %v753 = vadd.f32 %v131, %v737
    %v754 = vadd.f32 %v727, %v568
    %v763 = vrot.slane %v746, 2
    %v764 = vrot.slane %v747, 1
    %v765 = vsel %vm447, %v764, %v763
    %v766 = vsel %vm450, %v748, %v765
    %v767 = vrot.slane %v749, 7
    %v768 = vsel %vm453, %v767, %v766
    %v769 = vrot.slane %v750, 6
    %v770 = vsel %vm456, %v769, %v768
    %v771 = vrot.slane %v751, 5
    %v772 = vsel %vm459, %v771, %v770
    %v773 = vrot.slane %v752, 4
    %v774 = vsel %vm462, %v773, %v772
    %v775 = vrot.slane %v753, 3
    %v776 = vsel %vm465, %v775, %v774
    %v778 = vxor.u32 %v776, 2147483648
    %v779 = vxor.u32 %v754, 2147483648
    %v780 = vmul.f32 %v778, 1.442695
    %v781 = vpow.pop %v780
    %v782 = vmul.f32 %v779, 1.442695
    %v783 = vpow.pop %v782
    %v784 = vadd.f32 %v781, 1.0
    %v785 = vadd.f32 %v783, 1.0
    %v786 = vrcp.pop %v784
    %v787 = vmul.f32 %v784, %v786
    %v788 = vsub.f32 1.0, %v787
    %v789 = vmul.f32 %v786, %v788
    %v790 = vadd.f32 %v786, %v789
    %vm791 = vweird.f32 %v784
    %vm792 = vweird.f32 %v786
    %vm793 = vmor %vm791, %vm792
    %v794 = vsel %vm793, %v786, %v790
    %v795 = vand.u32 2147483647, %v784
    %vm796 = vcmp.eq.f32.partialorder %v795, 8.507059e+37
    %v797 = vand.u32 %v784, 2147483648
    %v798 = vor.u32 1.1754944e-38, %v797
    %v799 = vsel %vm796, %v798, %v794
    %v800 = vmul.f32 1.0, %v799
    %v801 = vrcp.pop %v785
    %v802 = vmul.f32 %v785, %v801
    %v803 = vsub.f32 1.0, %v802
    %v804 = vmul.f32 %v801, %v803
    %v805 = vadd.f32 %v801, %v804
    %vm806 = vweird.f32 %v785
    %vm807 = vweird.f32 %v801
    %vm808 = vmor %vm806, %vm807
    %v809 = vsel %vm808, %v801, %v805
    %v810 = vand.u32 2147483647, %v785
    %vm811 = vcmp.eq.f32.partialorder %v810, 8.507059e+37
    %v812 = vand.u32 %v785, 2147483648
    %v813 = vor.u32 1.1754944e-38, %v812
    %v814 = vsel %vm811, %v813, %v809
    %v815 = vmul.f32 1.0, %v814
    %v816 = vtanh.pop %v776
    %v817 = vtanh.pop %v754
    %v818 = vmul.f32 %v800, %v677
    %v819 = vmul.f32 %v815, %v678
    %822 = vrot.lane.b32.xlu0 %v816, 64
    %v823 = vpop.permute.xlu0 %822
    %824 = vrot.lane.b32.xlu0 %v817, 64
    %v825 = vpop.permute.xlu0 %824
    %v828 = vmul.f32 %v800, %v823
    %v829 = vmul.f32 %v815, %v825
    %832 = vrot.lane.b32.xlu0 %v828, 32
    %v833 = vpop.permute.xlu0 %832
    %834 = vrot.lane.b32.xlu0 %v829, 32
    %v835 = vpop.permute.xlu0 %834
    %v838 = vadd.f32 %v818, %v833
    %v839 = vadd.f32 %v819, %v835
    %v840 = vtanh.pop %v838
    %v841 = vtanh.pop %v839
    %844 = vrot.lane.b32.xlu0 %v840, 64
    %v845 = vpop.permute.xlu0 %844
    %846 = vrot.lane.b32.xlu0 %v841, 64
    %v847 = vpop.permute.xlu0 %846
    %v850 = vmul.f32 %v800, %v845
    %v851 = vmul.f32 %v815, %v847
    %853 = vrot.lane.b32.xlu0 %v850, 32
    %v854 = vpop.permute.xlu0 %853
    %857 = vrot.lane.b32.xlu0 %v851, 64
    %v858 = vpop.permute.xlu0 %857
    %v860 = vsel %vm470, %v854, %v858
    %v861 = vpack.c.bf16 %v860, %v860
    %v863 = vsel %vm513, %v861, 0
    %865 = vmatpush.bf16.msra.mxu0 0
    %866 = vmatpush.bf16.msra.mxu0 0
    %867 = vmatpush.bf16.msra.mxu0 0
    %868 = vmatpush.bf16.msra.mxu0 0
    %869 = vmatpush.bf16.msra.mxu0 %v503
    %870 = vmatpush.bf16.msra.mxu0 %v501
    %871 = vmatpush.bf16.msra.mxu0 %v499
    %872 = vmatpush.bf16.msra.mxu0 %v497
    %873 = vmatmul.bf16.gmra.mxu0 %v863
    %v874 = vpop.f32.mrf.mxu0
    %v875 = vadd.f32 0.0, %v874
    %v876 = vpop.f32.mrf.mxu0
    %877 = vdwg.mxu0
    %878 = vmatpush.bf16.msra.mxu0 0
    %879 = vmatpush.bf16.msra.mxu0 0
    %880 = vmatpush.bf16.msra.mxu0 0
    %881 = vmatpush.bf16.msra.mxu0 0
    %882 = vmatpush.bf16.msra.mxu0 %v504
    %883 = vmatpush.bf16.msra.mxu0 %v502
    %884 = vmatpush.bf16.msra.mxu0 %v500
    %885 = vmatpush.bf16.msra.mxu0 %v498
    %886 = vmatmul.bf16.gmra.mxu0 %v863
    %v887 = vpop.f32.mrf.mxu0
    %v888 = vadd.f32 0.0, %v887
    %v889 = vpop.f32.mrf.mxu0
    %890 = vdwg.mxu0
    %v892 = vrot.slane %v875, 5
    %v893 = vrot.slane %v875, 6
    %v894 = vrot.slane %v875, 7
    %v895 = vrot.slane %v875, 1
    %v896 = vrot.slane %v875, 2
    %v897 = vrot.slane %v875, 3
    %v898 = vrot.slane %v875, 4
    %v907 = vadd.f32 %v110, %v892
    %v908 = vadd.f32 %v113, %v893
    %v909 = vadd.f32 %v116, %v894
    %v910 = vadd.f32 %v119, %v875
    %v911 = vadd.f32 %v122, %v895
    %v912 = vadd.f32 %v125, %v896
    %v913 = vadd.f32 %v128, %v897
    %v914 = vadd.f32 %v131, %v898
    %v915 = vadd.f32 %v888, %v568
    %v924 = vrot.slane %v907, 3
    %v925 = vrot.slane %v908, 2
    %v926 = vsel %vm447, %v925, %v924
    %v927 = vrot.slane %v909, 1
    %v928 = vsel %vm450, %v927, %v926
    %v929 = vsel %vm453, %v910, %v928
    %v930 = vrot.slane %v911, 7
    %v931 = vsel %vm456, %v930, %v929
    %v932 = vrot.slane %v912, 6
    %v933 = vsel %vm459, %v932, %v931
    %v934 = vrot.slane %v913, 5
    %v935 = vsel %vm462, %v934, %v933
    %v936 = vrot.slane %v914, 4
    %v937 = vsel %vm465, %v936, %v935
    %v939 = vxor.u32 %v937, 2147483648
    %v940 = vxor.u32 %v915, 2147483648
    %v941 = vmul.f32 %v939, 1.442695
    %v942 = vpow.pop %v941
    %v943 = vmul.f32 %v940, 1.442695
    %v944 = vpow.pop %v943
    %v945 = vadd.f32 %v942, 1.0
    %v946 = vadd.f32 %v944, 1.0
    %v947 = vrcp.pop %v945
    %v948 = vmul.f32 %v945, %v947
    %v949 = vsub.f32 1.0, %v948
    %v950 = vmul.f32 %v947, %v949
    %v951 = vadd.f32 %v947, %v950
    %vm952 = vweird.f32 %v945
    %vm953 = vweird.f32 %v947
    %vm954 = vmor %vm952, %vm953
    %v955 = vsel %vm954, %v947, %v951
    %v956 = vand.u32 2147483647, %v945
    %vm957 = vcmp.eq.f32.partialorder %v956, 8.507059e+37
    %v958 = vand.u32 %v945, 2147483648
    %v959 = vor.u32 1.1754944e-38, %v958
    %v960 = vsel %vm957, %v959, %v955
    %v961 = vmul.f32 1.0, %v960
    %v962 = vrcp.pop %v946
    %v963 = vmul.f32 %v946, %v962
    %v964 = vsub.f32 1.0, %v963
    %v965 = vmul.f32 %v962, %v964
    %v966 = vadd.f32 %v962, %v965
    %vm967 = vweird.f32 %v946
    %vm968 = vweird.f32 %v962
    %vm969 = vmor %vm967, %vm968
    %v970 = vsel %vm969, %v962, %v966
    %v971 = vand.u32 2147483647, %v946
    %vm972 = vcmp.eq.f32.partialorder %v971, 8.507059e+37
    %v973 = vand.u32 %v946, 2147483648
    %v974 = vor.u32 1.1754944e-38, %v973
    %v975 = vsel %vm972, %v974, %v970
    %v976 = vmul.f32 1.0, %v975
    %v977 = vtanh.pop %v937
    %v978 = vtanh.pop %v915
    %v979 = vmul.f32 %v961, %v838
    %v980 = vmul.f32 %v976, %v839
    %983 = vrot.lane.b32.xlu0 %v977, 64
    %v984 = vpop.permute.xlu0 %983
    %985 = vrot.lane.b32.xlu0 %v978, 64
    %v986 = vpop.permute.xlu0 %985
    %v989 = vmul.f32 %v961, %v984
    %v990 = vmul.f32 %v976, %v986
    %993 = vrot.lane.b32.xlu0 %v989, 32
    %v994 = vpop.permute.xlu0 %993
    %995 = vrot.lane.b32.xlu0 %v990, 32
    %v996 = vpop.permute.xlu0 %995
    %v999 = vadd.f32 %v979, %v994
    %v1000 = vadd.f32 %v980, %v996
    %v1001 = vtanh.pop %v999
    %v1002 = vtanh.pop %v1000
    %1005 = vrot.lane.b32.xlu0 %v1001, 64
    %v1006 = vpop.permute.xlu0 %1005
    %1007 = vrot.lane.b32.xlu0 %v1002, 64
    %v1008 = vpop.permute.xlu0 %1007
    %v1011 = vmul.f32 %v961, %v1006
    %v1012 = vmul.f32 %v976, %v1008
    %1014 = vrot.lane.b32.xlu0 %v1011, 32
    %v1015 = vpop.permute.xlu0 %1014
    %1018 = vrot.lane.b32.xlu0 %v1012, 64
    %v1019 = vpop.permute.xlu0 %1018
    %v1021 = vsel %vm470, %v1015, %v1019
    %v1022 = vpack.c.bf16 %v1021, %v1021
    %v1024 = vsel %vm513, %v1022, 0
    %1026 = vmatpush.bf16.msra.mxu0 0
    %1027 = vmatpush.bf16.msra.mxu0 0
    %1028 = vmatpush.bf16.msra.mxu0 0
    %1029 = vmatpush.bf16.msra.mxu0 0
    %1030 = vmatpush.bf16.msra.mxu0 %v503
    %1031 = vmatpush.bf16.msra.mxu0 %v501
    %1032 = vmatpush.bf16.msra.mxu0 %v499
    %1033 = vmatpush.bf16.msra.mxu0 %v497
    %1034 = vmatmul.bf16.gmra.mxu0 %v1024
    %v1035 = vpop.f32.mrf.mxu0
    %v1036 = vadd.f32 0.0, %v1035
    %v1037 = vpop.f32.mrf.mxu0
    %1038 = vdwg.mxu0
    %1039 = vmatpush.bf16.msra.mxu0 0
    %1040 = vmatpush.bf16.msra.mxu0 0
    %1041 = vmatpush.bf16.msra.mxu0 0
    %1042 = vmatpush.bf16.msra.mxu0 0
    %1043 = vmatpush.bf16.msra.mxu0 %v504
    %1044 = vmatpush.bf16.msra.mxu0 %v502
    %1045 = vmatpush.bf16.msra.mxu0 %v500
    %1046 = vmatpush.bf16.msra.mxu0 %v498
    %1047 = vmatmul.bf16.gmra.mxu0 %v1024
    %v1048 = vpop.f32.mrf.mxu0
    %v1049 = vadd.f32 0.0, %v1048
    %v1050 = vpop.f32.mrf.mxu0
    %1051 = vdwg.mxu0
    %v1053 = vrot.slane %v1036, 4
    %v1054 = vrot.slane %v1036, 5
    %v1055 = vrot.slane %v1036, 6
    %v1056 = vrot.slane %v1036, 7
    %v1057 = vrot.slane %v1036, 1
    %v1058 = vrot.slane %v1036, 2
    %v1059 = vrot.slane %v1036, 3
    %v1068 = vadd.f32 %v110, %v1053
    %v1069 = vadd.f32 %v113, %v1054
    %v1070 = vadd.f32 %v116, %v1055
    %v1071 = vadd.f32 %v119, %v1056
    %v1072 = vadd.f32 %v122, %v1036
    %v1073 = vadd.f32 %v125, %v1057
    %v1074 = vadd.f32 %v128, %v1058
    %v1075 = vadd.f32 %v131, %v1059
    %v1076 = vadd.f32 %v1049, %v568
    %v1085 = vrot.slane %v1068, 4
    %v1086 = vrot.slane %v1069, 3
    %v1087 = vsel %vm447, %v1086, %v1085
    %v1088 = vrot.slane %v1070, 2
    %v1089 = vsel %vm450, %v1088, %v1087
    %v1090 = vrot.slane %v1071, 1
    %v1091 = vsel %vm453, %v1090, %v1089
    %v1092 = vsel %vm456, %v1072, %v1091
    %v1093 = vrot.slane %v1073, 7
    %v1094 = vsel %vm459, %v1093, %v1092
    %v1095 = vrot.slane %v1074, 6
    %v1096 = vsel %vm462, %v1095, %v1094
    %v1097 = vrot.slane %v1075, 5
    %v1098 = vsel %vm465, %v1097, %v1096
    %v1100 = vxor.u32 %v1098, 2147483648
    %v1101 = vxor.u32 %v1076, 2147483648
    %v1102 = vmul.f32 %v1100, 1.442695
    %v1103 = vpow.pop %v1102
    %v1104 = vmul.f32 %v1101, 1.442695
    %v1105 = vpow.pop %v1104
    %v1106 = vadd.f32 %v1103, 1.0
    %v1107 = vadd.f32 %v1105, 1.0
    %v1108 = vrcp.pop %v1106
    %v1109 = vmul.f32 %v1106, %v1108
    %v1110 = vsub.f32 1.0, %v1109
    %v1111 = vmul.f32 %v1108, %v1110
    %v1112 = vadd.f32 %v1108, %v1111
    %vm1113 = vweird.f32 %v1106
    %vm1114 = vweird.f32 %v1108
    %vm1115 = vmor %vm1113, %vm1114
    %v1116 = vsel %vm1115, %v1108, %v1112
    %v1117 = vand.u32 2147483647, %v1106
    %vm1118 = vcmp.eq.f32.partialorder %v1117, 8.507059e+37
    %v1119 = vand.u32 %v1106, 2147483648
    %v1120 = vor.u32 1.1754944e-38, %v1119
    %v1121 = vsel %vm1118, %v1120, %v1116
    %v1122 = vmul.f32 1.0, %v1121
    %v1123 = vrcp.pop %v1107
    %v1124 = vmul.f32 %v1107, %v1123
    %v1125 = vsub.f32 1.0, %v1124
    %v1126 = vmul.f32 %v1123, %v1125
    %v1127 = vadd.f32 %v1123, %v1126
    %vm1128 = vweird.f32 %v1107
    %vm1129 = vweird.f32 %v1123
    %vm1130 = vmor %vm1128, %vm1129
    %v1131 = vsel %vm1130, %v1123, %v1127
    %v1132 = vand.u32 2147483647, %v1107
    %vm1133 = vcmp.eq.f32.partialorder %v1132, 8.507059e+37
    %v1134 = vand.u32 %v1107, 2147483648
    %v1135 = vor.u32 1.1754944e-38, %v1134
    %v1136 = vsel %vm1133, %v1135, %v1131
    %v1137 = vmul.f32 1.0, %v1136
    %v1138 = vtanh.pop %v1098
    %v1139 = vtanh.pop %v1076
    %v1140 = vmul.f32 %v1122, %v999
    %v1141 = vmul.f32 %v1137, %v1000
    %1144 = vrot.lane.b32.xlu0 %v1138, 64
    %v1145 = vpop.permute.xlu0 %1144
    %1146 = vrot.lane.b32.xlu0 %v1139, 64
    %v1147 = vpop.permute.xlu0 %1146
    %v1150 = vmul.f32 %v1122, %v1145
    %v1151 = vmul.f32 %v1137, %v1147
    %1154 = vrot.lane.b32.xlu0 %v1150, 32
    %v1155 = vpop.permute.xlu0 %1154
    %1156 = vrot.lane.b32.xlu0 %v1151, 32
    %v1157 = vpop.permute.xlu0 %1156
    %v1160 = vadd.f32 %v1140, %v1155
    %v1161 = vadd.f32 %v1141, %v1157
    %v1162 = vtanh.pop %v1160
    %v1163 = vtanh.pop %v1161
    %1166 = vrot.lane.b32.xlu0 %v1162, 64
    %v1167 = vpop.permute.xlu0 %1166
    %1168 = vrot.lane.b32.xlu0 %v1163, 64
    %v1169 = vpop.permute.xlu0 %1168
    %v1172 = vmul.f32 %v1122, %v1167
    %v1173 = vmul.f32 %v1137, %v1169
    %1175 = vrot.lane.b32.xlu0 %v1172, 32
    %v1176 = vpop.permute.xlu0 %1175
    %1179 = vrot.lane.b32.xlu0 %v1173, 64
    %v1180 = vpop.permute.xlu0 %1179
    %v1182 = vsel %vm470, %v1176, %v1180
    %v1183 = vpack.c.bf16 %v1182, %v1182
    %v1185 = vsel %vm513, %v1183, 0
    %1187 = vmatpush.bf16.msra.mxu0 0
    %1188 = vmatpush.bf16.msra.mxu0 0
    %1189 = vmatpush.bf16.msra.mxu0 0
    %1190 = vmatpush.bf16.msra.mxu0 0
    %1191 = vmatpush.bf16.msra.mxu0 %v503
    %1192 = vmatpush.bf16.msra.mxu0 %v501
    %1193 = vmatpush.bf16.msra.mxu0 %v499
    %1194 = vmatpush.bf16.msra.mxu0 %v497
    %1195 = vmatmul.bf16.gmra.mxu0 %v1185
    %v1196 = vpop.f32.mrf.mxu0
    %v1197 = vadd.f32 0.0, %v1196
    %v1198 = vpop.f32.mrf.mxu0
    %1199 = vdwg.mxu0
    %1200 = vmatpush.bf16.msra.mxu0 0
    %1201 = vmatpush.bf16.msra.mxu0 0
    %1202 = vmatpush.bf16.msra.mxu0 0
    %1203 = vmatpush.bf16.msra.mxu0 0
    %1204 = vmatpush.bf16.msra.mxu0 %v504
    %1205 = vmatpush.bf16.msra.mxu0 %v502
    %1206 = vmatpush.bf16.msra.mxu0 %v500
    %1207 = vmatpush.bf16.msra.mxu0 %v498
    %1208 = vmatmul.bf16.gmra.mxu0 %v1185
    %v1209 = vpop.f32.mrf.mxu0
    %v1210 = vadd.f32 0.0, %v1209
    %v1211 = vpop.f32.mrf.mxu0
    %1212 = vdwg.mxu0
    %v1214 = vrot.slane %v1197, 3
    %v1215 = vrot.slane %v1197, 4
    %v1216 = vrot.slane %v1197, 5
    %v1217 = vrot.slane %v1197, 6
    %v1218 = vrot.slane %v1197, 7
    %v1219 = vrot.slane %v1197, 1
    %v1220 = vrot.slane %v1197, 2
    %v1229 = vadd.f32 %v110, %v1214
    %v1230 = vadd.f32 %v113, %v1215
    %v1231 = vadd.f32 %v116, %v1216
    %v1232 = vadd.f32 %v119, %v1217
    %v1233 = vadd.f32 %v122, %v1218
    %v1234 = vadd.f32 %v125, %v1197
    %v1235 = vadd.f32 %v128, %v1219
    %v1236 = vadd.f32 %v131, %v1220
    %v1237 = vadd.f32 %v1210, %v568
    %v1246 = vrot.slane %v1229, 5
    %v1247 = vrot.slane %v1230, 4
    %v1248 = vsel %vm447, %v1247, %v1246
    %v1249 = vrot.slane %v1231, 3
    %v1250 = vsel %vm450, %v1249, %v1248
    %v1251 = vrot.slane %v1232, 2
    %v1252 = vsel %vm453, %v1251, %v1250
    %v1253 = vrot.slane %v1233, 1
    %v1254 = vsel %vm456, %v1253, %v1252
    %v1255 = vsel %vm459, %v1234, %v1254
    %v1256 = vrot.slane %v1235, 7
    %v1257 = vsel %vm462, %v1256, %v1255
    %v1258 = vrot.slane %v1236, 6
    %v1259 = vsel %vm465, %v1258, %v1257
    %v1261 = vxor.u32 %v1259, 2147483648
    %v1262 = vxor.u32 %v1237, 2147483648
    %v1263 = vmul.f32 %v1261, 1.442695
    %v1264 = vpow.pop %v1263
    %v1265 = vmul.f32 %v1262, 1.442695
    %v1266 = vpow.pop %v1265
    %v1267 = vadd.f32 %v1264, 1.0
    %v1268 = vadd.f32 %v1266, 1.0
    %v1269 = vrcp.pop %v1267
    %v1270 = vmul.f32 %v1267, %v1269
    %v1271 = vsub.f32 1.0, %v1270
    %v1272 = vmul.f32 %v1269, %v1271
    %v1273 = vadd.f32 %v1269, %v1272
    %vm1274 = vweird.f32 %v1267
    %vm1275 = vweird.f32 %v1269
    %vm1276 = vmor %vm1274, %vm1275
    %v1277 = vsel %vm1276, %v1269, %v1273
    %v1278 = vand.u32 2147483647, %v1267
    %vm1279 = vcmp.eq.f32.partialorder %v1278, 8.507059e+37
    %v1280 = vand.u32 %v1267, 2147483648
    %v1281 = vor.u32 1.1754944e-38, %v1280
    %v1282 = vsel %vm1279, %v1281, %v1277
    %v1283 = vmul.f32 1.0, %v1282
    %v1284 = vrcp.pop %v1268
    %v1285 = vmul.f32 %v1268, %v1284
    %v1286 = vsub.f32 1.0, %v1285
    %v1287 = vmul.f32 %v1284, %v1286
    %v1288 = vadd.f32 %v1284, %v1287
    %vm1289 = vweird.f32 %v1268
    %vm1290 = vweird.f32 %v1284
    %vm1291 = vmor %vm1289, %vm1290
    %v1292 = vsel %vm1291, %v1284, %v1288
    %v1293 = vand.u32 2147483647, %v1268
    %vm1294 = vcmp.eq.f32.partialorder %v1293, 8.507059e+37
    %v1295 = vand.u32 %v1268, 2147483648
    %v1296 = vor.u32 1.1754944e-38, %v1295
    %v1297 = vsel %vm1294, %v1296, %v1292
    %v1298 = vmul.f32 1.0, %v1297
    %v1299 = vtanh.pop %v1259
    %v1300 = vtanh.pop %v1237
    %v1301 = vmul.f32 %v1283, %v1160
    %v1302 = vmul.f32 %v1298, %v1161
    %1305 = vrot.lane.b32.xlu0 %v1299, 64
    %v1306 = vpop.permute.xlu0 %1305
    %1307 = vrot.lane.b32.xlu0 %v1300, 64
    %v1308 = vpop.permute.xlu0 %1307
    %v1311 = vmul.f32 %v1283, %v1306
    %v1312 = vmul.f32 %v1298, %v1308
    %1315 = vrot.lane.b32.xlu0 %v1311, 32
    %v1316 = vpop.permute.xlu0 %1315
    %1317 = vrot.lane.b32.xlu0 %v1312, 32
    %v1318 = vpop.permute.xlu0 %1317
    %v1321 = vadd.f32 %v1301, %v1316
    %v1322 = vadd.f32 %v1302, %v1318
    %v1323 = vtanh.pop %v1321
    %v1324 = vtanh.pop %v1322
    %1327 = vrot.lane.b32.xlu0 %v1323, 64
    %v1328 = vpop.permute.xlu0 %1327
    %1329 = vrot.lane.b32.xlu0 %v1324, 64
    %v1330 = vpop.permute.xlu0 %1329
    %v1333 = vmul.f32 %v1283, %v1328
    %v1334 = vmul.f32 %v1298, %v1330
    %1336 = vrot.lane.b32.xlu0 %v1333, 32
    %v1337 = vpop.permute.xlu0 %1336
    %1340 = vrot.lane.b32.xlu0 %v1334, 64
    %v1341 = vpop.permute.xlu0 %1340
    %v1343 = vsel %vm470, %v1337, %v1341
    %v1344 = vpack.c.bf16 %v1343, %v1343
    %v1346 = vsel %vm513, %v1344, 0
    %1348 = vmatpush.bf16.msra.mxu0 0
    %1349 = vmatpush.bf16.msra.mxu0 0
    %1350 = vmatpush.bf16.msra.mxu0 0
    %1351 = vmatpush.bf16.msra.mxu0 0
    %1352 = vmatpush.bf16.msra.mxu0 %v503
    %1353 = vmatpush.bf16.msra.mxu0 %v501
    %1354 = vmatpush.bf16.msra.mxu0 %v499
    %1355 = vmatpush.bf16.msra.mxu0 %v497
    %1356 = vmatmul.bf16.gmra.mxu0 %v1346
    %v1357 = vpop.f32.mrf.mxu0
    %v1358 = vadd.f32 0.0, %v1357
    %v1359 = vpop.f32.mrf.mxu0
    %1360 = vdwg.mxu0
    %1361 = vmatpush.bf16.msra.mxu0 0
    %1362 = vmatpush.bf16.msra.mxu0 0
    %1363 = vmatpush.bf16.msra.mxu0 0
    %1364 = vmatpush.bf16.msra.mxu0 0
    %1365 = vmatpush.bf16.msra.mxu0 %v504
    %1366 = vmatpush.bf16.msra.mxu0 %v502
    %1367 = vmatpush.bf16.msra.mxu0 %v500
    %1368 = vmatpush.bf16.msra.mxu0 %v498
    %1369 = vmatmul.bf16.gmra.mxu0 %v1346
    %v1370 = vpop.f32.mrf.mxu0
    %v1371 = vadd.f32 0.0, %v1370
    %v1372 = vpop.f32.mrf.mxu0
    %1373 = vdwg.mxu0
    %v1375 = vrot.slane %v1358, 2
    %v1376 = vrot.slane %v1358, 3
    %v1377 = vrot.slane %v1358, 4
    %v1378 = vrot.slane %v1358, 5
    %v1379 = vrot.slane %v1358, 6
    %v1380 = vrot.slane %v1358, 7
    %v1381 = vrot.slane %v1358, 1
    %v1390 = vadd.f32 %v110, %v1375
    %v1391 = vadd.f32 %v113, %v1376
    %v1392 = vadd.f32 %v116, %v1377
    %v1393 = vadd.f32 %v119, %v1378
    %v1394 = vadd.f32 %v122, %v1379
    %v1395 = vadd.f32 %v125, %v1380
    %v1396 = vadd.f32 %v128, %v1358
    %v1397 = vadd.f32 %v131, %v1381
    %v1398 = vadd.f32 %v1371, %v568
    %v1407 = vrot.slane %v1390, 6
    %v1408 = vrot.slane %v1391, 5
    %v1409 = vsel %vm447, %v1408, %v1407
    %v1410 = vrot.slane %v1392, 4
    %v1411 = vsel %vm450, %v1410, %v1409
    %v1412 = vrot.slane %v1393, 3
    %v1413 = vsel %vm453, %v1412, %v1411
    %v1414 = vrot.slane %v1394, 2
    %v1415 = vsel %vm456, %v1414, %v1413
    %v1416 = vrot.slane %v1395, 1
    %v1417 = vsel %vm459, %v1416, %v1415
    %v1418 = vsel %vm462, %v1396, %v1417
    %v1419 = vrot.slane %v1397, 7
    %v1420 = vsel %vm465, %v1419, %v1418
    %v1422 = vxor.u32 %v1420, 2147483648
    %v1423 = vxor.u32 %v1398, 2147483648
    %v1424 = vmul.f32 %v1422, 1.442695
    %v1425 = vpow.pop %v1424
    %v1426 = vmul.f32 %v1423, 1.442695
    %v1427 = vpow.pop %v1426
    %v1428 = vadd.f32 %v1425, 1.0
    %v1429 = vadd.f32 %v1427, 1.0
    %v1430 = vrcp.pop %v1428
    %v1431 = vmul.f32 %v1428, %v1430
    %v1432 = vsub.f32 1.0, %v1431
    %v1433 = vmul.f32 %v1430, %v1432
    %v1434 = vadd.f32 %v1430, %v1433
    %vm1435 = vweird.f32 %v1428
    %vm1436 = vweird.f32 %v1430
    %vm1437 = vmor %vm1435, %vm1436
    %v1438 = vsel %vm1437, %v1430, %v1434
    %v1439 = vand.u32 2147483647, %v1428
    %vm1440 = vcmp.eq.f32.partialorder %v1439, 8.507059e+37
    %v1441 = vand.u32 %v1428, 2147483648
    %v1442 = vor.u32 1.1754944e-38, %v1441
    %v1443 = vsel %vm1440, %v1442, %v1438
    %v1444 = vmul.f32 1.0, %v1443
    %v1445 = vrcp.pop %v1429
    %v1446 = vmul.f32 %v1429, %v1445
    %v1447 = vsub.f32 1.0, %v1446
    %v1448 = vmul.f32 %v1445, %v1447
    %v1449 = vadd.f32 %v1445, %v1448
    %vm1450 = vweird.f32 %v1429
    %vm1451 = vweird.f32 %v1445
    %vm1452 = vmor %vm1450, %vm1451
    %v1453 = vsel %vm1452, %v1445, %v1449
    %v1454 = vand.u32 2147483647, %v1429
    %vm1455 = vcmp.eq.f32.partialorder %v1454, 8.507059e+37
    %v1456 = vand.u32 %v1429, 2147483648
    %v1457 = vor.u32 1.1754944e-38, %v1456
    %v1458 = vsel %vm1455, %v1457, %v1453
    %v1459 = vmul.f32 1.0, %v1458
    %v1460 = vtanh.pop %v1420
    %v1461 = vtanh.pop %v1398
    %v1462 = vmul.f32 %v1444, %v1321
    %v1463 = vmul.f32 %v1459, %v1322
    %1466 = vrot.lane.b32.xlu0 %v1460, 64
    %v1467 = vpop.permute.xlu0 %1466
    %1468 = vrot.lane.b32.xlu0 %v1461, 64
    %v1469 = vpop.permute.xlu0 %1468
    %v1472 = vmul.f32 %v1444, %v1467
    %v1473 = vmul.f32 %v1459, %v1469
    %1476 = vrot.lane.b32.xlu0 %v1472, 32
    %v1477 = vpop.permute.xlu0 %1476
    %1478 = vrot.lane.b32.xlu0 %v1473, 32
    %v1479 = vpop.permute.xlu0 %1478
    %v1482 = vadd.f32 %v1462, %v1477
    %v1483 = vadd.f32 %v1463, %v1479
    %v1484 = vtanh.pop %v1482
    %v1485 = vtanh.pop %v1483
    %1488 = vrot.lane.b32.xlu0 %v1484, 64
    %v1489 = vpop.permute.xlu0 %1488
    %1490 = vrot.lane.b32.xlu0 %v1485, 64
    %v1491 = vpop.permute.xlu0 %1490
    %v1494 = vmul.f32 %v1444, %v1489
    %v1495 = vmul.f32 %v1459, %v1491
    %1497 = vrot.lane.b32.xlu0 %v1494, 32
    %v1498 = vpop.permute.xlu0 %1497
    %1501 = vrot.lane.b32.xlu0 %v1495, 64
    %v1502 = vpop.permute.xlu0 %1501
    %v1504 = vsel %vm470, %v1498, %v1502
    %v1505 = vpack.c.bf16 %v1504, %v1504
    %v1507 = vsel %vm513, %v1505, 0
    %1509 = vmatpush.bf16.msra.mxu0 0
    %1510 = vmatpush.bf16.msra.mxu0 0
    %1511 = vmatpush.bf16.msra.mxu0 0
    %1512 = vmatpush.bf16.msra.mxu0 0
    %1513 = vmatpush.bf16.msra.mxu0 %v503
    %1514 = vmatpush.bf16.msra.mxu0 %v501
    %1515 = vmatpush.bf16.msra.mxu0 %v499
    %1516 = vmatpush.bf16.msra.mxu0 %v497
    %1517 = vmatmul.bf16.gmra.mxu0 %v1507
    %v1518 = vpop.f32.mrf.mxu0
    %v1519 = vadd.f32 0.0, %v1518
    %v1520 = vpop.f32.mrf.mxu0
    %1521 = vdwg.mxu0
    %1522 = vmatpush.bf16.msra.mxu0 0
    %1523 = vmatpush.bf16.msra.mxu0 0
    %1524 = vmatpush.bf16.msra.mxu0 0
    %1525 = vmatpush.bf16.msra.mxu0 0
    %1526 = vmatpush.bf16.msra.mxu0 %v504
    %1527 = vmatpush.bf16.msra.mxu0 %v502
    %1528 = vmatpush.bf16.msra.mxu0 %v500
    %1529 = vmatpush.bf16.msra.mxu0 %v498
    %1530 = vmatmul.bf16.gmra.mxu0 %v1507
    %v1531 = vpop.f32.mrf.mxu0
    %v1532 = vadd.f32 0.0, %v1531
    %v1533 = vpop.f32.mrf.mxu0
    %1534 = vdwg.mxu0
    %v1536 = vrot.slane %v1519, 1
    %v1537 = vrot.slane %v1519, 2
    %v1538 = vrot.slane %v1519, 3
    %v1539 = vrot.slane %v1519, 4
    %v1540 = vrot.slane %v1519, 5
    %v1541 = vrot.slane %v1519, 6
    %v1542 = vrot.slane %v1519, 7
    %v1551 = vadd.f32 %v110, %v1536
    %v1552 = vadd.f32 %v113, %v1537
    %v1553 = vadd.f32 %v116, %v1538
    %v1554 = vadd.f32 %v119, %v1539
    %v1555 = vadd.f32 %v122, %v1540
    %v1556 = vadd.f32 %v125, %v1541
    %v1557 = vadd.f32 %v128, %v1542
    %v1558 = vadd.f32 %v131, %v1519
    %v1559 = vadd.f32 %v1532, %v568
    %v1568 = vrot.slane %v1551, 7
    %v1569 = vrot.slane %v1552, 6
    %v1570 = vsel %vm447, %v1569, %v1568
    %v1571 = vrot.slane %v1553, 5
    %v1572 = vsel %vm450, %v1571, %v1570
    %v1573 = vrot.slane %v1554, 4
    %v1574 = vsel %vm453, %v1573, %v1572
    %v1575 = vrot.slane %v1555, 3
    %v1576 = vsel %vm456, %v1575, %v1574
    %v1577 = vrot.slane %v1556, 2
    %v1578 = vsel %vm459, %v1577, %v1576
    %v1579 = vrot.slane %v1557, 1
    %v1580 = vsel %vm462, %v1579, %v1578
    %v1581 = vsel %vm465, %v1558, %v1580
    %v1583 = vxor.u32 %v1581, 2147483648
    %v1584 = vxor.u32 %v1559, 2147483648
    %v1585 = vmul.f32 %v1583, 1.442695
    %v1586 = vpow.pop %v1585
    %v1587 = vmul.f32 %v1584, 1.442695
    %v1588 = vpow.pop %v1587
    %v1589 = vadd.f32 %v1586, 1.0
    %v1590 = vadd.f32 %v1588, 1.0
    %v1591 = vrcp.pop %v1589
    %v1592 = vmul.f32 %v1589, %v1591
    %v1593 = vsub.f32 1.0, %v1592
    %v1594 = vmul.f32 %v1591, %v1593
    %v1595 = vadd.f32 %v1591, %v1594
    %vm1596 = vweird.f32 %v1589
    %vm1597 = vweird.f32 %v1591
    %vm1598 = vmor %vm1596, %vm1597
    %v1599 = vsel %vm1598, %v1591, %v1595
    %v1600 = vand.u32 2147483647, %v1589
    %vm1601 = vcmp.eq.f32.partialorder %v1600, 8.507059e+37
    %v1602 = vand.u32 %v1589, 2147483648
    %v1603 = vor.u32 1.1754944e-38, %v1602
    %v1604 = vsel %vm1601, %v1603, %v1599
    %v1605 = vmul.f32 1.0, %v1604
    %v1606 = vrcp.pop %v1590
    %v1607 = vmul.f32 %v1590, %v1606
    %v1608 = vsub.f32 1.0, %v1607
    %v1609 = vmul.f32 %v1606, %v1608
    %v1610 = vadd.f32 %v1606, %v1609
    %vm1611 = vweird.f32 %v1590
    %vm1612 = vweird.f32 %v1606
    %vm1613 = vmor %vm1611, %vm1612
    %v1614 = vsel %vm1613, %v1606, %v1610
    %v1615 = vand.u32 2147483647, %v1590
    %vm1616 = vcmp.eq.f32.partialorder %v1615, 8.507059e+37
    %v1617 = vand.u32 %v1590, 2147483648
    %v1618 = vor.u32 1.1754944e-38, %v1617
    %v1619 = vsel %vm1616, %v1618, %v1614
    %v1620 = vmul.f32 1.0, %v1619
    %v1621 = vtanh.pop %v1581
    %v1622 = vtanh.pop %v1559
    %v1623 = vmul.f32 %v1605, %v1482
    %v1624 = vmul.f32 %v1620, %v1483
    %1627 = vrot.lane.b32.xlu0 %v1621, 64
    %v1628 = vpop.permute.xlu0 %1627
    %1629 = vrot.lane.b32.xlu0 %v1622, 64
    %v1630 = vpop.permute.xlu0 %1629
    %v1633 = vmul.f32 %v1605, %v1628
    %v1634 = vmul.f32 %v1620, %v1630
    %1637 = vrot.lane.b32.xlu0 %v1633, 32
    %v1638 = vpop.permute.xlu0 %1637
    %1639 = vrot.lane.b32.xlu0 %v1634, 32
    %v1640 = vpop.permute.xlu0 %1639
    %v1643 = vadd.f32 %v1623, %v1638
    %v1644 = vadd.f32 %v1624, %v1640
    %v1645 = vtanh.pop %v1643
    %v1646 = vtanh.pop %v1644
    %1649 = vrot.lane.b32.xlu0 %v1645, 64
    %v1650 = vpop.permute.xlu0 %1649
    %1651 = vrot.lane.b32.xlu0 %v1646, 64
    %v1652 = vpop.permute.xlu0 %1651
    %v1655 = vmul.f32 %v1605, %v1650
    %v1656 = vmul.f32 %v1620, %v1652
    %1658 = vrot.lane.b32.xlu0 %v1655, 32
    %v1659 = vpop.permute.xlu0 %1658
    %1662 = vrot.lane.b32.xlu0 %v1656, 64
    %v1663 = vpop.permute.xlu0 %1662
    %v1665 = vsel %vm470, %v1659, %v1663
    %v1666 = vpack.c.bf16 %v1665, %v1665
    %v1668 = vsel %vm513, %v1666, 0
    %1670 = vmatpush.bf16.msra.mxu0 0
    %1671 = vmatpush.bf16.msra.mxu0 0
    %1672 = vmatpush.bf16.msra.mxu0 0
    %1673 = vmatpush.bf16.msra.mxu0 0
    %1674 = vmatpush.bf16.msra.mxu0 %v504
    %1675 = vmatpush.bf16.msra.mxu0 %v502
    %1676 = vmatpush.bf16.msra.mxu0 %v500
    %1677 = vmatpush.bf16.msra.mxu0 %v498
    %1678 = vmatmul.bf16.gmra.mxu0 %v1668
    %v1679 = vpop.f32.mrf.mxu0
    %v1680 = vadd.f32 0.0, %v1679
    %v1681 = vpop.f32.mrf.mxu0
    %1682 = vdwg.mxu0
    %v1683 = vadd.f32 %v1680, %v568
    %v1684 = vxor.u32 %v1683, 2147483648
    %v1685 = vmul.f32 %v1684, 1.442695
    %v1686 = vpow.pop %v1685
    %v1687 = vadd.f32 %v1686, 1.0
    %v1688 = vrcp.pop %v1687
    %v1689 = vmul.f32 %v1687, %v1688
    %v1690 = vsub.f32 1.0, %v1689
    %v1691 = vmul.f32 %v1688, %v1690
    %v1692 = vadd.f32 %v1688, %v1691
    %vm1693 = vweird.f32 %v1687
    %vm1694 = vweird.f32 %v1688
    %vm1695 = vmor %vm1693, %vm1694
    %v1696 = vsel %vm1695, %v1688, %v1692
    %v1697 = vand.u32 2147483647, %v1687
    %vm1698 = vcmp.eq.f32.partialorder %v1697, 8.507059e+37
    %v1699 = vand.u32 %v1687, 2147483648
    %v1700 = vor.u32 1.1754944e-38, %v1699
    %v1701 = vsel %vm1698, %v1700, %v1696
    %v1702 = vmul.f32 1.0, %v1701
    %v1703 = vtanh.pop %v1683
    %v1704 = vmul.f32 %v1702, %v1644
    %1706 = vrot.lane.b32.xlu0 %v1703, 64
    %v1707 = vpop.permute.xlu0 %1706
    %v1709 = vmul.f32 %v1702, %v1707
    %1711 = vrot.lane.b32.xlu0 %v1709, 32
    %v1712 = vpop.permute.xlu0 %1711
    %v1714 = vadd.f32 %v1704, %v1712
    %v1715 = vtanh.pop %v1714
    %1717 = vrot.lane.b32.xlu0 %v1715, 64
    %v1718 = vpop.permute.xlu0 %1717
    %v1720 = vmul.f32 %v1702, %v1718
    %v1721 = vld [vmem:[%s5] sm:$0xff]
    %v1722 = vld [vmem:[%s5 + $0x8] sm:$0xff]
    %v1723 = vld [vmem:[%s5 + $0x10] sm:$0xff]
    %v1724 = vld [vmem:[%s5 + $0x18] sm:$0xff]
    %v1725 = vld [vmem:[%s6] sm:$0x1]
    %v1727 = vperm.slane %v1725, 0
    %1730 = vrot.lane.b32.xlu0 %v1720, 32
    %v1731 = vpop.permute.xlu0 %1730
    %v1732 = vsel %vm470, %v1731, 0
    %1734 = vmatpush.msra.mxu0 0.0
    %1735 = vmatpush.msra.mxu0 0.0
    %1736 = vmatpush.msra.mxu0 0.0
    %1737 = vmatpush.msra.mxu0 0.0
    %1738 = vmatpush.msra.mxu0 0.0
    %1739 = vmatpush.msra.mxu0 0.0
    %1740 = vmatpush.msra.mxu0 0.0
    %1741 = vmatpush.msra.mxu0 0.0
    %1742 = vmatpush.msra.mxu0 0.0
    %1743 = vmatpush.msra.mxu0 0.0
    %1744 = vmatpush.msra.mxu0 0.0
    %1745 = vmatpush.msra.mxu0 0.0
    %1746 = vmatpush.msra.mxu0 %v1724
    %1747 = vmatpush.msra.mxu0 %v1723
    %1748 = vmatpush.msra.mxu0 %v1722
    %1749 = vmatpush.msra.mxu0 %v1721
    %1750 = vmatmul.f32.gmra.mxu0 %v1732
    %v1751 = vpop.f32.mrf.mxu0
    %v1752 = vadd.f32 %v1727, %v1751
    %1753 = vdwg.mxu0
    %v1754 = vld [vmem:[#allocation2] sm:$0xff]
    %v1755 = vld [vmem:[#allocation2 + $0x8] sm:$0xff]
    %v1756 = vld [vmem:[#allocation2 + $0x10] sm:$0xff]
    %v1757 = vld [vmem:[#allocation2 + $0x18] sm:$0xff]
    %v1758 = vld [vmem:[#allocation2 + $0x20] sm:$0xff]
    %v1759 = vld [vmem:[#allocation2 + $0x28] sm:$0xff]
    %v1760 = vld [vmem:[#allocation2 + $0x30] sm:$0xff]
    %v1761 = vld [vmem:[#allocation2 + $0x38] sm:$0xff]
    %v1762 = vld [vmem:[#allocation2 + $0x40] sm:$0xff]
    %v1763 = vld [vmem:[#allocation2 + $0x48] sm:$0xff]
    %v1764 = vld [vmem:[#allocation2 + $0x50] sm:$0xff]
    %v1765 = vld [vmem:[#allocation2 + $0x58] sm:$0xff]
    %v1766 = vld [vmem:[#allocation2 + $0x60] sm:$0xff]
    %v1767 = vld [vmem:[#allocation2 + $0x68] sm:$0xff]
    %v1768 = vld [vmem:[#allocation2 + $0x70] sm:$0xff]
    %v1769 = vld [vmem:[#allocation2 + $0x78] sm:$0xff]
    %v1770 = vld [vmem:[%s8] sm:$0x1]
    %v1772 = vperm.slane %v1770, 0
    %1774 = vmatpush.msra.mxu0 %v1769
    %1775 = vmatpush.msra.mxu0 %v1768
    %1776 = vmatpush.msra.mxu0 %v1767
    %1777 = vmatpush.msra.mxu0 %v1766
    %1778 = vmatpush.msra.mxu0 %v1765
    %1779 = vmatpush.msra.mxu0 %v1764
    %1780 = vmatpush.msra.mxu0 %v1763
    %1781 = vmatpush.msra.mxu0 %v1762
    %1782 = vmatpush.msra.mxu0 %v1761
    %1783 = vmatpush.msra.mxu0 %v1760
    %1784 = vmatpush.msra.mxu0 %v1759
    %1785 = vmatpush.msra.mxu0 %v1758
    %1786 = vmatpush.msra.mxu0 %v1757
    %1787 = vmatpush.msra.mxu0 %v1756
    %1788 = vmatpush.msra.mxu0 %v1755
    %1789 = vmatpush.msra.mxu0 %v1754
    %1790 = vmatmul.f32.gmra.mxu0 %v1752
    %v1791 = vpop.f32.mrf.mxu0
    %v1792 = vadd.f32 %v1772, %v1791
    %1793 = vdwg.mxu0
    %1794 = vst [vmem:[#allocation5] sm:$0xff] %v1792
    // Predicated region
    $region42: #{pure_lstm_forward.1} parent=1 // pred_check
      _
    $region43: #{pure_lstm_forward.1} parent=1 // pred_check_branch
      %1796 = sbr.rel (0) target = $region45
    $region44: #{pure_lstm_forward.1} parent=1 // pred_region
      %1798 = vsyncadd [#allocation4], 0
      %s1800 = sshll.u32 [#allocation5], 4
      %s1801 = int_to_ptr.vmem [resolvable:$true] %s1800
      %s1802 = sshll.u32 %s9, 4
      %s1803 = int_to_ptr.hbm [resolvable:$true] %s1802
      %1805 = dma.vmem_to_hbm [thread:$0]  %s1801, 128, %s1803, [#allocation4]
    $region45: #{pure_lstm_forward.1} parent=1 // pred_fallthru
      _
    // Predicated region
    $region46: #{pure_lstm_forward.1} parent=1 // pred_check
      _
    $region47: #{pure_lstm_forward.1} parent=1 // pred_check_branch
      %1807 = sbr.rel (0) target = $region49
    $region48: #{pure_lstm_forward.1} parent=1 // pred_region
      %1809 = dma.done [#allocation4], 128
    $region49: #{pure_lstm_forward.1} parent=1 // pred_fallthru
      _
    %1810 = vsyncpa [#allocation3], 1
    %1811 = vsyncpa [#allocation4], 1

</llo_original>
